<compile_context>
chip_gen: v5e
topology: v5e:2x2
jax: 0.10.0
libtpu: 0.0.40
codegen_flags: <defaults>
</compile_context>

<pallas_src>
import jax
import jax.numpy as jnp
from jax.experimental import pallas as pl
from jax.experimental.pallas import tpu as pltpu

# ----------------------------- config ---------------------------------------
BATCH = 2
SEQ = 8
HIDDEN = 32
NUM_HEADS = 4
HEAD_DIM = HIDDEN // NUM_HEADS
INTERMEDIATE = 64
NUM_LAYERS = 2
VOCAB = 30
MAX_POS = 16
TYPE_VOCAB = 2
LN_EPS = 1e-12
DTYPE = jnp.float32
ATTN_SCALE = 1.0 / (HEAD_DIM ** 0.5)

# packed-slab layout ----------------------------------------------------------
SLAB_LANES = 128
# bf16 weight slab: per layer [qkv_w (32,96) | ffn_w1 (32,64) | ffn_w2 (64,32)]
W_PER_LAYER = HIDDEN + HIDDEN + INTERMEDIATE          # 128 rows
W_ROWS = NUM_LAYERS * W_PER_LAYER                     # 256
# f32 param slab: 8 header rows (emb LN), then per layer 8 vector rows + o_w
P_HDR = 8
P_PER_LAYER = 8 + HIDDEN                              # 40 rows (8-aligned)
P_ROWS = P_HDR + NUM_LAYERS * P_PER_LAYER             # 88


# ----------------------------- in-kernel helpers -----------------------------
def _layernorm(x, g, b):
    # Single-pass stats: sum and sum-of-squares back-to-back on the live vreg.
    inv_n = 1.0 / x.shape[-1]
    s = jnp.sum(x, axis=-1, keepdims=True)
    ss = jnp.sum(x * x, axis=-1, keepdims=True)
    mean = s * inv_n
    var = ss * inv_n - mean * mean
    inv = jax.lax.rsqrt(var + LN_EPS)
    return (x - mean) * inv * g + b


def _gelu(x):
    # TODO(synk): HuggingFace BERT uses erf-GELU; tanh approximation used here.
    return 0.5 * x * (1.0 + jnp.tanh(0.7978845608028654 * (x + 0.044715 * x * x * x)))


def _mm_bf16(x_f32, w_bf16):
    # bf16 MXU operands (cast immediately before the dot), f32 accumulation.
    return jnp.dot(x_f32.astype(jnp.bfloat16), w_bf16,
                   preferred_element_type=jnp.float32)


# ----------------------------- fused kernel ----------------------------------
def _bert_fused_kernel(emb_ref, w_ref, p_ref, out_ref):
    # Single invocation over the full (B*S, H) slab; everything VMEM-resident.
    P = p_ref[...]                                    # (P_ROWS, 128) f32

    emb_g = P[0:1, :HIDDEN]
    emb_b = P[1:2, :HIDDEN]
    h = _layernorm(emb_ref[...], emb_g, emb_b)        # (B*S, H) f32
    states = [h]

    for l in range(NUM_LAYERS):                       # static unroll (2 layers)
        wb = l * W_PER_LAYER
        pb = P_HDR + l * P_PER_LAYER

        # packed weight slices (static offsets, lane-aligned rows)
        qkv_w = w_ref[wb:wb + HIDDEN, :3 * HIDDEN]                       # (32,96) bf16
        w1 = w_ref[wb + HIDDEN:wb + 2 * HIDDEN, :INTERMEDIATE]           # (32,64) bf16
        w2 = w_ref[wb + 2 * HIDDEN:wb + 2 * HIDDEN + INTERMEDIATE, :HIDDEN]  # (64,32) bf16

        qkv_b = P[pb + 0:pb + 1, :3 * HIDDEN]
        o_b = P[pb + 1:pb + 2, :HIDDEN]
        attn_g = P[pb + 2:pb + 3, :HIDDEN]
        attn_b = P[pb + 3:pb + 4, :HIDDEN]
        b1 = P[pb + 4:pb + 5, :INTERMEDIATE]
        b2 = P[pb + 5:pb + 6, :HIDDEN]
        ffn_g = P[pb + 6:pb + 7, :HIDDEN]
        ffn_b = P[pb + 7:pb + 8, :HIDDEN]
        o_w = P[pb + 8:pb + 8 + HIDDEN, :HIDDEN]                          # (32,32) f32

        # ---- fused QKV projection over both batches: (16,32)@(32,96) --------
        qkv = _mm_bf16(h, qkv_w) + qkv_b                                  # (16, 96) f32

        # ---- head- & batch-batched attention ---------------------------------
        # Stack per-(batch, head) tiles into (B*NH, S, Dh) = (8, 8, 8).
        q3 = jnp.stack(
            [qkv[b * SEQ:(b + 1) * SEQ, hd * HEAD_DIM:(hd + 1) * HEAD_DIM]
             for b in range(BATCH) for hd in range(NUM_HEADS)], axis=0) * ATTN_SCALE
        k3 = jnp.stack(
            [qkv[b * SEQ:(b + 1) * SEQ,
                 HIDDEN + hd * HEAD_DIM:HIDDEN + (hd + 1) * HEAD_DIM]
             for b in range(BATCH) for hd in range(NUM_HEADS)], axis=0)
        v3 = jnp.stack(
            [qkv[b * SEQ:(b + 1) * SEQ,
                 2 * HIDDEN + hd * HEAD_DIM:2 * HIDDEN + (hd + 1) * HEAD_DIM]
             for b in range(BATCH) for hd in range(NUM_HEADS)], axis=0)

        # One batched Q·K^T (contract last dims, batch over dim 0): (8, S, S)
        scores = jax.lax.dot_general(
            q3, k3, (((2,), (2,)), ((0,), (0,))),
            preferred_element_type=jnp.float32)

        # Softmax issued once over the whole stacked block.
        m = jnp.max(scores, axis=-1, keepdims=True)
        p = jnp.exp(scores - m)
        p = p * pl.reciprocal(jnp.sum(p, axis=-1, keepdims=True), approx=True)

        # One batched P·V: (B*NH, S, Dh)
        ctx3 = jax.lax.dot_general(
            p, v3, (((2,), (1,)), ((0,), (0,))),
            preferred_element_type=jnp.float32)

        # Re-assemble contexts to (B*S, H): concat heads along lanes,
        # batches along sublanes, then ONE output projection.
        ctx = jnp.concatenate(
            [jnp.concatenate(
                [ctx3[b * NUM_HEADS + hd] for hd in range(NUM_HEADS)], axis=-1)
             for b in range(BATCH)], axis=0)                              # (16, 32)

        attn_out = jnp.dot(ctx, o_w, preferred_element_type=jnp.float32) + o_b

        # ---- residual + LayerNorm (fused epilogue) ----------------------------
        h = _layernorm(h + attn_out, attn_g, attn_b)

        # ---- feed-forward -----------------------------------------------------
        ffn = _gelu(_mm_bf16(h, w1) + b1)
        ffn = _mm_bf16(ffn, w2) + b2
        h = _layernorm(h + ffn, ffn_g, ffn_b)

        states.append(h)

    # torch.add(hidden_states[-2], hidden_states[-1])
    out_ref[...] = (states[-2] + states[-1]).astype(out_ref.dtype)


# ----------------------------- parameter init --------------------------------
def init_params(key):
    keys = iter(jax.random.split(key, 16))

    def dense(shape, scale=0.02):
        return (scale * jax.random.normal(next(keys), shape)).astype(jnp.float32)

    w_slab = jnp.zeros((W_ROWS, SLAB_LANES), jnp.float32)
    p_slab = jnp.zeros((P_ROWS, SLAB_LANES), jnp.float32)

    # embedding tables (gathered in plain JAX)
    word_emb = dense((VOCAB, HIDDEN))
    pos_emb = dense((MAX_POS, HIDDEN))
    type_emb = dense((TYPE_VOCAB, HIDDEN))

    # global embedding LayerNorm (gamma=1, beta=0)
    p_slab = p_slab.at[0, :HIDDEN].set(1.0)

    for l in range(NUM_LAYERS):
        wb = l * W_PER_LAYER
        pb = P_HDR + l * P_PER_LAYER
        # bf16 MXU weights
        w_slab = w_slab.at[wb:wb + HIDDEN, :3 * HIDDEN].set(
            dense((HIDDEN, 3 * HIDDEN)))
        w_slab = w_slab.at[wb + HIDDEN:wb + 2 * HIDDEN, :INTERMEDIATE].set(
            dense((HIDDEN, INTERMEDIATE)))
        w_slab = w_slab.at[wb + 2 * HIDDEN:wb + 2 * HIDDEN + INTERMEDIATE, :HIDDEN].set(
            dense((INTERMEDIATE, HIDDEN)))
        # f32 params: o_w + LN gammas (biases/betas stay zero)
        p_slab = p_slab.at[pb + 8:pb + 8 + HIDDEN, :HIDDEN].set(
            dense((HIDDEN, HIDDEN)))
        p_slab = p_slab.at[pb + 2, :HIDDEN].set(1.0)   # attn LN gamma
        p_slab = p_slab.at[pb + 6, :HIDDEN].set(1.0)   # ffn  LN gamma

    return {
        "word_emb": word_emb,
        "pos_emb": pos_emb,
        "type_emb": type_emb,
        "w_slab": w_slab.astype(jnp.bfloat16),   # (256, 128) bf16
        "p_slab": p_slab,                        # (88, 128)  f32
    }


# ----------------------------- forward ---------------------------------------
def bert_mid_layer_forward(params, x_ids):
    """Returns hidden_states[-2] + hidden_states[-1], shape (B, S, H)."""
    batch, seq = x_ids.shape
    assert batch == BATCH and seq == SEQ, "kernel specialised to (BATCH, SEQ)"

    # embeddings (gather is plain-JAX glue; no attention mask / type-0 tokens)
    word = params["word_emb"][x_ids]                       # (B, S, H)
    pos = params["pos_emb"][:seq][None, :, :]              # (1, S, H)
    typ = params["type_emb"][0][None, None, :]             # (1, 1, H)
    emb = (word + pos + typ).reshape(batch * seq, HIDDEN).astype(DTYPE)

    vmem = pl.BlockSpec(memory_space=pltpu.MemorySpace.VMEM)

    out2d = pl.pallas_call(
        _bert_fused_kernel,
        out_shape=jax.ShapeDtypeStruct((batch * seq, HIDDEN), DTYPE),
        in_specs=[vmem, vmem, vmem],     # 3 full-array DMAs, no grid
        out_specs=vmem,
    )(emb, params["w_slab"], params["p_slab"])

    return out2d.reshape(batch, seq, HIDDEN)


# ----------------------------- main -------------------------------------------
if __name__ == "__main__":
    key = jax.random.PRNGKey(0)
    pkey, xkey = jax.random.split(key)

    params = init_params(pkey)
    x = jax.random.randint(xkey, (BATCH, SEQ), 0, VOCAB, dtype=jnp.int32)

    out = jax.jit(bert_mid_layer_forward)(params, x)
    jax.block_until_ready(out)

    assert out.shape == (BATCH, SEQ, HIDDEN)
    assert out.dtype == DTYPE
    assert bool(jnp.all(jnp.isfinite(out)))
    print("KERNEL_OK")
</pallas_src>

<mosaic_0001>
module attributes {stable_mosaic.version = 11 : i64} {
  func.func @_bert_fused_kernel(%arg0: memref<16x32xf32, #tpu.memory_space<vmem>>, %arg1: memref<256x128xbf16, #tpu.memory_space<vmem>>, %arg2: memref<88x128xf32, #tpu.memory_space<vmem>>, %arg3: memref<16x32xf32, #tpu.memory_space<vmem>>) attributes {dimension_semantics = [], scalar_prefetch = 0 : i64, scratch_operands = 0 : i64, tpu.core_type = #tpu.core_type<tc>} {
    %c0 = arith.constant 0 : index
    %c0_0 = arith.constant 0 : index
    %0 = vector.load %arg2[%c0, %c0_0] : memref<88x128xf32, #tpu.memory_space<vmem>>, vector<88x128xf32>
    %1 = vector.extract_strided_slice %0 {offsets = [0, 0], sizes = [1, 32], strides = [1, 1]} : vector<88x128xf32> to vector<1x32xf32>
    %2 = vector.extract_strided_slice %0 {offsets = [1, 0], sizes = [1, 32], strides = [1, 1]} : vector<88x128xf32> to vector<1x32xf32>
    %c0_1 = arith.constant 0 : index
    %c0_2 = arith.constant 0 : index
    %3 = vector.load %arg0[%c0_1, %c0_2] : memref<16x32xf32, #tpu.memory_space<vmem>>, vector<16x32xf32>
    %cst = arith.constant dense<0.000000e+00> : vector<16xf32>
    %4 = vector.multi_reduction <add>, %3, %cst [1] : vector<16x32xf32> to vector<16xf32>
    %5 = vector.shape_cast %4 : vector<16xf32> to vector<16x1xf32>
    %6 = arith.mulf %3, %3 : vector<16x32xf32>
    %cst_3 = arith.constant dense<0.000000e+00> : vector<16xf32>
    %7 = vector.multi_reduction <add>, %6, %cst_3 [1] : vector<16x32xf32> to vector<16xf32>
    %8 = vector.shape_cast %7 : vector<16xf32> to vector<16x1xf32>
    %cst_4 = arith.constant 3.125000e-02 : f32
    %9 = vector.broadcast %cst_4 : f32 to vector<16x1xf32>
    %10 = arith.mulf %5, %9 : vector<16x1xf32>
    %cst_5 = arith.constant 3.125000e-02 : f32
    %11 = vector.broadcast %cst_5 : f32 to vector<16x1xf32>
    %12 = arith.mulf %8, %11 : vector<16x1xf32>
    %13 = arith.mulf %10, %10 : vector<16x1xf32>
    %14 = arith.subf %12, %13 : vector<16x1xf32>
    %cst_6 = arith.constant 9.99999996E-13 : f32
    %15 = vector.broadcast %cst_6 : f32 to vector<16x1xf32>
    %16 = arith.addf %14, %15 : vector<16x1xf32>
    %17 = math.rsqrt %16 : vector<16x1xf32>
    %18 = vector.broadcast %10 : vector<16x1xf32> to vector<16x32xf32>
    %19 = arith.subf %3, %18 : vector<16x32xf32>
    %20 = vector.broadcast %17 : vector<16x1xf32> to vector<16x32xf32>
    %21 = arith.mulf %19, %20 : vector<16x32xf32>
    %22 = vector.broadcast %1 : vector<1x32xf32> to vector<16x32xf32>
    %23 = arith.mulf %21, %22 : vector<16x32xf32>
    %24 = vector.broadcast %2 : vector<1x32xf32> to vector<16x32xf32>
    %25 = arith.addf %23, %24 : vector<16x32xf32>
    %c0_7 = arith.constant 0 : index
    %c0_8 = arith.constant 0 : index
    %26 = vector.load %arg1[%c0_7, %c0_8] : memref<256x128xbf16, #tpu.memory_space<vmem>>, vector<32x96xbf16>
    %c32 = arith.constant 32 : index
    %c0_9 = arith.constant 0 : index
    %27 = vector.load %arg1[%c32, %c0_9] : memref<256x128xbf16, #tpu.memory_space<vmem>>, vector<32x64xbf16>
    %c64 = arith.constant 64 : index
    %c0_10 = arith.constant 0 : index
    %28 = vector.load %arg1[%c64, %c0_10] : memref<256x128xbf16, #tpu.memory_space<vmem>>, vector<64x32xbf16>
    %29 = vector.extract_strided_slice %0 {offsets = [8, 0], sizes = [1, 96], strides = [1, 1]} : vector<88x128xf32> to vector<1x96xf32>
    %30 = vector.extract_strided_slice %0 {offsets = [9, 0], sizes = [1, 32], strides = [1, 1]} : vector<88x128xf32> to vector<1x32xf32>
    %31 = vector.extract_strided_slice %0 {offsets = [10, 0], sizes = [1, 32], strides = [1, 1]} : vector<88x128xf32> to vector<1x32xf32>
    %32 = vector.extract_strided_slice %0 {offsets = [11, 0], sizes = [1, 32], strides = [1, 1]} : vector<88x128xf32> to vector<1x32xf32>
    %33 = vector.extract_strided_slice %0 {offsets = [12, 0], sizes = [1, 64], strides = [1, 1]} : vector<88x128xf32> to vector<1x64xf32>
    %34 = vector.extract_strided_slice %0 {offsets = [13, 0], sizes = [1, 32], strides = [1, 1]} : vector<88x128xf32> to vector<1x32xf32>
    %35 = vector.extract_strided_slice %0 {offsets = [14, 0], sizes = [1, 32], strides = [1, 1]} : vector<88x128xf32> to vector<1x32xf32>
    %36 = vector.extract_strided_slice %0 {offsets = [15, 0], sizes = [1, 32], strides = [1, 1]} : vector<88x128xf32> to vector<1x32xf32>
    %37 = vector.extract_strided_slice %0 {offsets = [16, 0], sizes = [32, 32], strides = [1, 1]} : vector<88x128xf32> to vector<32x32xf32>
    %38 = arith.truncf %25 : vector<16x32xf32> to vector<16x32xbf16>
    %cst_11 = arith.constant dense<0.000000e+00> : vector<16x96xf32>
    %39 = tpu.matmul %38, %26, %cst_11 {dimension_numbers = #tpu.dot_dimension_numbers<[1], [0], [0], [1], [0, 0, 1, 1], [], []>} : vector<16x32xbf16>, vector<32x96xbf16>, vector<16x96xf32> -> vector<16x96xf32>
    %40 = vector.broadcast %29 : vector<1x96xf32> to vector<16x96xf32>
    %41 = arith.addf %39, %40 : vector<16x96xf32>
    %42 = vector.extract_strided_slice %41 {offsets = [0, 0], sizes = [8, 8], strides = [1, 1]} : vector<16x96xf32> to vector<8x8xf32>
    %43 = vector.extract_strided_slice %41 {offsets = [0, 8], sizes = [8, 8], strides = [1, 1]} : vector<16x96xf32> to vector<8x8xf32>
    %44 = vector.extract_strided_slice %41 {offsets = [0, 16], sizes = [8, 8], strides = [1, 1]} : vector<16x96xf32> to vector<8x8xf32>
    %45 = vector.extract_strided_slice %41 {offsets = [0, 24], sizes = [8, 8], strides = [1, 1]} : vector<16x96xf32> to vector<8x8xf32>
    %46 = vector.extract_strided_slice %41 {offsets = [8, 0], sizes = [8, 8], strides = [1, 1]} : vector<16x96xf32> to vector<8x8xf32>
    %47 = vector.extract_strided_slice %41 {offsets = [8, 8], sizes = [8, 8], strides = [1, 1]} : vector<16x96xf32> to vector<8x8xf32>
    %48 = vector.extract_strided_slice %41 {offsets = [8, 16], sizes = [8, 8], strides = [1, 1]} : vector<16x96xf32> to vector<8x8xf32>
    %49 = vector.extract_strided_slice %41 {offsets = [8, 24], sizes = [8, 8], strides = [1, 1]} : vector<16x96xf32> to vector<8x8xf32>
    %50 = vector.shape_cast %42 : vector<8x8xf32> to vector<1x8x8xf32>
    %51 = vector.shape_cast %43 : vector<8x8xf32> to vector<1x8x8xf32>
    %52 = vector.shape_cast %44 : vector<8x8xf32> to vector<1x8x8xf32>
    %53 = vector.shape_cast %45 : vector<8x8xf32> to vector<1x8x8xf32>
    %54 = vector.shape_cast %46 : vector<8x8xf32> to vector<1x8x8xf32>
    %55 = vector.shape_cast %47 : vector<8x8xf32> to vector<1x8x8xf32>
    %56 = vector.shape_cast %48 : vector<8x8xf32> to vector<1x8x8xf32>
    %57 = vector.shape_cast %49 : vector<8x8xf32> to vector<1x8x8xf32>
    %58 = tpu.concatenate %50, %51, %52, %53, %54, %55, %56, %57 in 0 : vector<1x8x8xf32>, vector<1x8x8xf32>, vector<1x8x8xf32>, vector<1x8x8xf32>, vector<1x8x8xf32>, vector<1x8x8xf32>, vector<1x8x8xf32>, vector<1x8x8xf32> -> vector<8x8x8xf32>
    %cst_12 = arith.constant 0.353553385 : f32
    %59 = vector.broadcast %cst_12 : f32 to vector<8x8x8xf32>
    %60 = arith.mulf %58, %59 : vector<8x8x8xf32>
    %61 = vector.extract_strided_slice %41 {offsets = [0, 32], sizes = [8, 8], strides = [1, 1]} : vector<16x96xf32> to vector<8x8xf32>
    %62 = vector.extract_strided_slice %41 {offsets = [0, 40], sizes = [8, 8], strides = [1, 1]} : vector<16x96xf32> to vector<8x8xf32>
    %63 = vector.extract_strided_slice %41 {offsets = [0, 48], sizes = [8, 8], strides = [1, 1]} : vector<16x96xf32> to vector<8x8xf32>
    %64 = vector.extract_strided_slice %41 {offsets = [0, 56], sizes = [8, 8], strides = [1, 1]} : vector<16x96xf32> to vector<8x8xf32>
    %65 = vector.extract_strided_slice %41 {offsets = [8, 32], sizes = [8, 8], strides = [1, 1]} : vector<16x96xf32> to vector<8x8xf32>
    %66 = vector.extract_strided_slice %41 {offsets = [8, 40], sizes = [8, 8], strides = [1, 1]} : vector<16x96xf32> to vector<8x8xf32>
    %67 = vector.extract_strided_slice %41 {offsets = [8, 48], sizes = [8, 8], strides = [1, 1]} : vector<16x96xf32> to vector<8x8xf32>
    %68 = vector.extract_strided_slice %41 {offsets = [8, 56], sizes = [8, 8], strides = [1, 1]} : vector<16x96xf32> to vector<8x8xf32>
    %69 = vector.shape_cast %61 : vector<8x8xf32> to vector<1x8x8xf32>
    %70 = vector.shape_cast %62 : vector<8x8xf32> to vector<1x8x8xf32>
    %71 = vector.shape_cast %63 : vector<8x8xf32> to vector<1x8x8xf32>
    %72 = vector.shape_cast %64 : vector<8x8xf32> to vector<1x8x8xf32>
    %73 = vector.shape_cast %65 : vector<8x8xf32> to vector<1x8x8xf32>
    %74 = vector.shape_cast %66 : vector<8x8xf32> to vector<1x8x8xf32>
    %75 = vector.shape_cast %67 : vector<8x8xf32> to vector<1x8x8xf32>
    %76 = vector.shape_cast %68 : vector<8x8xf32> to vector<1x8x8xf32>
    %77 = tpu.concatenate %69, %70, %71, %72, %73, %74, %75, %76 in 0 : vector<1x8x8xf32>, vector<1x8x8xf32>, vector<1x8x8xf32>, vector<1x8x8xf32>, vector<1x8x8xf32>, vector<1x8x8xf32>, vector<1x8x8xf32>, vector<1x8x8xf32> -> vector<8x8x8xf32>
    %78 = vector.extract_strided_slice %41 {offsets = [0, 64], sizes = [8, 8], strides = [1, 1]} : vector<16x96xf32> to vector<8x8xf32>
    %79 = vector.extract_strided_slice %41 {offsets = [0, 72], sizes = [8, 8], strides = [1, 1]} : vector<16x96xf32> to vector<8x8xf32>
    %80 = vector.extract_strided_slice %41 {offsets = [0, 80], sizes = [8, 8], strides = [1, 1]} : vector<16x96xf32> to vector<8x8xf32>
    %81 = vector.extract_strided_slice %41 {offsets = [0, 88], sizes = [8, 8], strides = [1, 1]} : vector<16x96xf32> to vector<8x8xf32>
    %82 = vector.extract_strided_slice %41 {offsets = [8, 64], sizes = [8, 8], strides = [1, 1]} : vector<16x96xf32> to vector<8x8xf32>
    %83 = vector.extract_strided_slice %41 {offsets = [8, 72], sizes = [8, 8], strides = [1, 1]} : vector<16x96xf32> to vector<8x8xf32>
    %84 = vector.extract_strided_slice %41 {offsets = [8, 80], sizes = [8, 8], strides = [1, 1]} : vector<16x96xf32> to vector<8x8xf32>
    %85 = vector.extract_strided_slice %41 {offsets = [8, 88], sizes = [8, 8], strides = [1, 1]} : vector<16x96xf32> to vector<8x8xf32>
    %86 = vector.shape_cast %78 : vector<8x8xf32> to vector<1x8x8xf32>
    %87 = vector.shape_cast %79 : vector<8x8xf32> to vector<1x8x8xf32>
    %88 = vector.shape_cast %80 : vector<8x8xf32> to vector<1x8x8xf32>
    %89 = vector.shape_cast %81 : vector<8x8xf32> to vector<1x8x8xf32>
    %90 = vector.shape_cast %82 : vector<8x8xf32> to vector<1x8x8xf32>
    %91 = vector.shape_cast %83 : vector<8x8xf32> to vector<1x8x8xf32>
    %92 = vector.shape_cast %84 : vector<8x8xf32> to vector<1x8x8xf32>
    %93 = vector.shape_cast %85 : vector<8x8xf32> to vector<1x8x8xf32>
    %94 = tpu.concatenate %86, %87, %88, %89, %90, %91, %92, %93 in 0 : vector<1x8x8xf32>, vector<1x8x8xf32>, vector<1x8x8xf32>, vector<1x8x8xf32>, vector<1x8x8xf32>, vector<1x8x8xf32>, vector<1x8x8xf32>, vector<1x8x8xf32> -> vector<8x8x8xf32>
    %cst_13 = arith.constant dense<0.000000e+00> : vector<8x8x8xf32>
    %95 = tpu.matmul %60, %77, %cst_13 {dimension_numbers = #tpu.dot_dimension_numbers<[2], [2], [1], [1], [0, 0, 0, 1, 1, 1], [0], [0]>} : vector<8x8x8xf32>, vector<8x8x8xf32>, vector<8x8x8xf32> -> vector<8x8x8xf32>
    %cst_14 = arith.constant dense<0xFF800000> : vector<8x8xf32>
    %96 = vector.multi_reduction <maximumf>, %95, %cst_14 [2] : vector<8x8x8xf32> to vector<8x8xf32>
    %97 = vector.shape_cast %96 : vector<8x8xf32> to vector<8x8x1xf32>
    %98 = vector.broadcast %97 : vector<8x8x1xf32> to vector<8x8x8xf32>
    %99 = arith.subf %95, %98 : vector<8x8x8xf32>
    %100 = math.exp %99 : vector<8x8x8xf32>
    %cst_15 = arith.constant dense<0.000000e+00> : vector<8x8xf32>
    %101 = vector.multi_reduction <add>, %100, %cst_15 [2] : vector<8x8x8xf32> to vector<8x8xf32>
    %102 = vector.shape_cast %101 : vector<8x8xf32> to vector<8x8x1xf32>
    %103 = tpu.reciprocal %102 {approx = true} : vector<8x8x1xf32> -> vector<8x8x1xf32>
    %104 = vector.broadcast %103 : vector<8x8x1xf32> to vector<8x8x8xf32>
    %105 = arith.mulf %100, %104 : vector<8x8x8xf32>
    %cst_16 = arith.constant dense<0.000000e+00> : vector<8x8x8xf32>
    %106 = tpu.matmul %105, %94, %cst_16 {dimension_numbers = #tpu.dot_dimension_numbers<[2], [1], [1], [2], [0, 0, 0, 1, 1, 2], [0], [0]>} : vector<8x8x8xf32>, vector<8x8x8xf32>, vector<8x8x8xf32> -> vector<8x8x8xf32>
    %107 = vector.extract_strided_slice %106 {offsets = [0, 0, 0], sizes = [1, 8, 8], strides = [1, 1, 1]} : vector<8x8x8xf32> to vector<1x8x8xf32>
    %108 = vector.shape_cast %107 : vector<1x8x8xf32> to vector<8x8xf32>
    %109 = vector.extract_strided_slice %106 {offsets = [1, 0, 0], sizes = [1, 8, 8], strides = [1, 1, 1]} : vector<8x8x8xf32> to vector<1x8x8xf32>
    %110 = vector.shape_cast %109 : vector<1x8x8xf32> to vector<8x8xf32>
    %111 = vector.extract_strided_slice %106 {offsets = [2, 0, 0], sizes = [1, 8, 8], strides = [1, 1, 1]} : vector<8x8x8xf32> to vector<1x8x8xf32>
    %112 = vector.shape_cast %111 : vector<1x8x8xf32> to vector<8x8xf32>
    %113 = vector.extract_strided_slice %106 {offsets = [3, 0, 0], sizes = [1, 8, 8], strides = [1, 1, 1]} : vector<8x8x8xf32> to vector<1x8x8xf32>
    %114 = vector.shape_cast %113 : vector<1x8x8xf32> to vector<8x8xf32>
    %115 = tpu.concatenate %108, %110, %112, %114 in 1 : vector<8x8xf32>, vector<8x8xf32>, vector<8x8xf32>, vector<8x8xf32> -> vector<8x32xf32>
    %116 = vector.extract_strided_slice %106 {offsets = [4, 0, 0], sizes = [1, 8, 8], strides = [1, 1, 1]} : vector<8x8x8xf32> to vector<1x8x8xf32>
    %117 = vector.shape_cast %116 : vector<1x8x8xf32> to vector<8x8xf32>
    %118 = vector.extract_strided_slice %106 {offsets = [5, 0, 0], sizes = [1, 8, 8], strides = [1, 1, 1]} : vector<8x8x8xf32> to vector<1x8x8xf32>
    %119 = vector.shape_cast %118 : vector<1x8x8xf32> to vector<8x8xf32>
    %120 = vector.extract_strided_slice %106 {offsets = [6, 0, 0], sizes = [1, 8, 8], strides = [1, 1, 1]} : vector<8x8x8xf32> to vector<1x8x8xf32>
    %121 = vector.shape_cast %120 : vector<1x8x8xf32> to vector<8x8xf32>
    %122 = vector.extract_strided_slice %106 {offsets = [7, 0, 0], sizes = [1, 8, 8], strides = [1, 1, 1]} : vector<8x8x8xf32> to vector<1x8x8xf32>
    %123 = vector.shape_cast %122 : vector<1x8x8xf32> to vector<8x8xf32>
    %124 = tpu.concatenate %117, %119, %121, %123 in 1 : vector<8x8xf32>, vector<8x8xf32>, vector<8x8xf32>, vector<8x8xf32> -> vector<8x32xf32>
    %125 = tpu.concatenate %115, %124 in 0 : vector<8x32xf32>, vector<8x32xf32> -> vector<16x32xf32>
    %cst_17 = arith.constant dense<0.000000e+00> : vector<16x32xf32>
    %126 = tpu.matmul %125, %37, %cst_17 {dimension_numbers = #tpu.dot_dimension_numbers<[1], [0], [0], [1], [0, 0, 1, 1], [], []>} : vector<16x32xf32>, vector<32x32xf32>, vector<16x32xf32> -> vector<16x32xf32>
    %127 = vector.broadcast %30 : vector<1x32xf32> to vector<16x32xf32>
    %128 = arith.addf %126, %127 : vector<16x32xf32>
    %129 = arith.addf %25, %128 : vector<16x32xf32>
    %cst_18 = arith.constant dense<0.000000e+00> : vector<16xf32>
    %130 = vector.multi_reduction <add>, %129, %cst_18 [1] : vector<16x32xf32> to vector<16xf32>
    %131 = vector.shape_cast %130 : vector<16xf32> to vector<16x1xf32>
    %132 = arith.mulf %129, %129 : vector<16x32xf32>
    %cst_19 = arith.constant dense<0.000000e+00> : vector<16xf32>
    %133 = vector.multi_reduction <add>, %132, %cst_19 [1] : vector<16x32xf32> to vector<16xf32>
    %134 = vector.shape_cast %133 : vector<16xf32> to vector<16x1xf32>
    %cst_20 = arith.constant 3.125000e-02 : f32
    %135 = vector.broadcast %cst_20 : f32 to vector<16x1xf32>
    %136 = arith.mulf %131, %135 : vector<16x1xf32>
    %cst_21 = arith.constant 3.125000e-02 : f32
    %137 = vector.broadcast %cst_21 : f32 to vector<16x1xf32>
    %138 = arith.mulf %134, %137 : vector<16x1xf32>
    %139 = arith.mulf %136, %136 : vector<16x1xf32>
    %140 = arith.subf %138, %139 : vector<16x1xf32>
    %cst_22 = arith.constant 9.99999996E-13 : f32
    %141 = vector.broadcast %cst_22 : f32 to vector<16x1xf32>
    %142 = arith.addf %140, %141 : vector<16x1xf32>
    %143 = math.rsqrt %142 : vector<16x1xf32>
    %144 = vector.broadcast %136 : vector<16x1xf32> to vector<16x32xf32>
    %145 = arith.subf %129, %144 : vector<16x32xf32>
    %146 = vector.broadcast %143 : vector<16x1xf32> to vector<16x32xf32>
    %147 = arith.mulf %145, %146 : vector<16x32xf32>
    %148 = vector.broadcast %31 : vector<1x32xf32> to vector<16x32xf32>
    %149 = arith.mulf %147, %148 : vector<16x32xf32>
    %150 = vector.broadcast %32 : vector<1x32xf32> to vector<16x32xf32>
    %151 = arith.addf %149, %150 : vector<16x32xf32>
    %152 = arith.truncf %151 : vector<16x32xf32> to vector<16x32xbf16>
    %cst_23 = arith.constant dense<0.000000e+00> : vector<16x64xf32>
    %153 = tpu.matmul %152, %27, %cst_23 {dimension_numbers = #tpu.dot_dimension_numbers<[1], [0], [0], [1], [0, 0, 1, 1], [], []>} : vector<16x32xbf16>, vector<32x64xbf16>, vector<16x64xf32> -> vector<16x64xf32>
    %154 = vector.broadcast %33 : vector<1x64xf32> to vector<16x64xf32>
    %155 = arith.addf %153, %154 : vector<16x64xf32>
    %cst_24 = arith.constant 5.000000e-01 : f32
    %156 = vector.broadcast %cst_24 : f32 to vector<16x64xf32>
    %157 = arith.mulf %156, %155 : vector<16x64xf32>
    %cst_25 = arith.constant 4.471500e-02 : f32
    %158 = vector.broadcast %cst_25 : f32 to vector<16x64xf32>
    %159 = arith.mulf %158, %155 : vector<16x64xf32>
    %160 = arith.mulf %159, %155 : vector<16x64xf32>
    %161 = arith.mulf %160, %155 : vector<16x64xf32>
    %162 = arith.addf %155, %161 : vector<16x64xf32>
    %cst_26 = arith.constant 0.797884583 : f32
    %163 = vector.broadcast %cst_26 : f32 to vector<16x64xf32>
    %164 = arith.mulf %163, %162 : vector<16x64xf32>
    %165 = math.tanh %164 : vector<16x64xf32>
    %cst_27 = arith.constant 1.000000e+00 : f32
    %166 = vector.broadcast %cst_27 : f32 to vector<16x64xf32>
    %167 = arith.addf %166, %165 : vector<16x64xf32>
    %168 = arith.mulf %157, %167 : vector<16x64xf32>
    %169 = arith.truncf %168 : vector<16x64xf32> to vector<16x64xbf16>
    %cst_28 = arith.constant dense<0.000000e+00> : vector<16x32xf32>
    %170 = tpu.matmul %169, %28, %cst_28 {dimension_numbers = #tpu.dot_dimension_numbers<[1], [0], [0], [1], [0, 0, 1, 1], [], []>} : vector<16x64xbf16>, vector<64x32xbf16>, vector<16x32xf32> -> vector<16x32xf32>
    %171 = vector.broadcast %34 : vector<1x32xf32> to vector<16x32xf32>
    %172 = arith.addf %170, %171 : vector<16x32xf32>
    %173 = arith.addf %151, %172 : vector<16x32xf32>
    %cst_29 = arith.constant dense<0.000000e+00> : vector<16xf32>
    %174 = vector.multi_reduction <add>, %173, %cst_29 [1] : vector<16x32xf32> to vector<16xf32>
    %175 = vector.shape_cast %174 : vector<16xf32> to vector<16x1xf32>
    %176 = arith.mulf %173, %173 : vector<16x32xf32>
    %cst_30 = arith.constant dense<0.000000e+00> : vector<16xf32>
    %177 = vector.multi_reduction <add>, %176, %cst_30 [1] : vector<16x32xf32> to vector<16xf32>
    %178 = vector.shape_cast %177 : vector<16xf32> to vector<16x1xf32>
    %cst_31 = arith.constant 3.125000e-02 : f32
    %179 = vector.broadcast %cst_31 : f32 to vector<16x1xf32>
    %180 = arith.mulf %175, %179 : vector<16x1xf32>
    %cst_32 = arith.constant 3.125000e-02 : f32
    %181 = vector.broadcast %cst_32 : f32 to vector<16x1xf32>
    %182 = arith.mulf %178, %181 : vector<16x1xf32>
    %183 = arith.mulf %180, %180 : vector<16x1xf32>
    %184 = arith.subf %182, %183 : vector<16x1xf32>
    %cst_33 = arith.constant 9.99999996E-13 : f32
    %185 = vector.broadcast %cst_33 : f32 to vector<16x1xf32>
    %186 = arith.addf %184, %185 : vector<16x1xf32>
    %187 = math.rsqrt %186 : vector<16x1xf32>
    %188 = vector.broadcast %180 : vector<16x1xf32> to vector<16x32xf32>
    %189 = arith.subf %173, %188 : vector<16x32xf32>
    %190 = vector.broadcast %187 : vector<16x1xf32> to vector<16x32xf32>
    %191 = arith.mulf %189, %190 : vector<16x32xf32>
    %192 = vector.broadcast %35 : vector<1x32xf32> to vector<16x32xf32>
    %193 = arith.mulf %191, %192 : vector<16x32xf32>
    %194 = vector.broadcast %36 : vector<1x32xf32> to vector<16x32xf32>
    %195 = arith.addf %193, %194 : vector<16x32xf32>
    %c128 = arith.constant 128 : index
    %c0_34 = arith.constant 0 : index
    %196 = vector.load %arg1[%c128, %c0_34] : memref<256x128xbf16, #tpu.memory_space<vmem>>, vector<32x96xbf16>
    %c160 = arith.constant 160 : index
    %c0_35 = arith.constant 0 : index
    %197 = vector.load %arg1[%c160, %c0_35] : memref<256x128xbf16, #tpu.memory_space<vmem>>, vector<32x64xbf16>
    %c192 = arith.constant 192 : index
    %c0_36 = arith.constant 0 : index
    %198 = vector.load %arg1[%c192, %c0_36] : memref<256x128xbf16, #tpu.memory_space<vmem>>, vector<64x32xbf16>
    %199 = vector.extract_strided_slice %0 {offsets = [48, 0], sizes = [1, 96], strides = [1, 1]} : vector<88x128xf32> to vector<1x96xf32>
    %200 = vector.extract_strided_slice %0 {offsets = [49, 0], sizes = [1, 32], strides = [1, 1]} : vector<88x128xf32> to vector<1x32xf32>
    %201 = vector.extract_strided_slice %0 {offsets = [50, 0], sizes = [1, 32], strides = [1, 1]} : vector<88x128xf32> to vector<1x32xf32>
    %202 = vector.extract_strided_slice %0 {offsets = [51, 0], sizes = [1, 32], strides = [1, 1]} : vector<88x128xf32> to vector<1x32xf32>
    %203 = vector.extract_strided_slice %0 {offsets = [52, 0], sizes = [1, 64], strides = [1, 1]} : vector<88x128xf32> to vector<1x64xf32>
    %204 = vector.extract_strided_slice %0 {offsets = [53, 0], sizes = [1, 32], strides = [1, 1]} : vector<88x128xf32> to vector<1x32xf32>
    %205 = vector.extract_strided_slice %0 {offsets = [54, 0], sizes = [1, 32], strides = [1, 1]} : vector<88x128xf32> to vector<1x32xf32>
    %206 = vector.extract_strided_slice %0 {offsets = [55, 0], sizes = [1, 32], strides = [1, 1]} : vector<88x128xf32> to vector<1x32xf32>
    %207 = vector.extract_strided_slice %0 {offsets = [56, 0], sizes = [32, 32], strides = [1, 1]} : vector<88x128xf32> to vector<32x32xf32>
    %208 = arith.truncf %195 : vector<16x32xf32> to vector<16x32xbf16>
    %cst_37 = arith.constant dense<0.000000e+00> : vector<16x96xf32>
    %209 = tpu.matmul %208, %196, %cst_37 {dimension_numbers = #tpu.dot_dimension_numbers<[1], [0], [0], [1], [0, 0, 1, 1], [], []>} : vector<16x32xbf16>, vector<32x96xbf16>, vector<16x96xf32> -> vector<16x96xf32>
    %210 = vector.broadcast %199 : vector<1x96xf32> to vector<16x96xf32>
    %211 = arith.addf %209, %210 : vector<16x96xf32>
    %212 = vector.extract_strided_slice %211 {offsets = [0, 0], sizes = [8, 8], strides = [1, 1]} : vector<16x96xf32> to vector<8x8xf32>
    %213 = vector.extract_strided_slice %211 {offsets = [0, 8], sizes = [8, 8], strides = [1, 1]} : vector<16x96xf32> to vector<8x8xf32>
    %214 = vector.extract_strided_slice %211 {offsets = [0, 16], sizes = [8, 8], strides = [1, 1]} : vector<16x96xf32> to vector<8x8xf32>
    %215 = vector.extract_strided_slice %211 {offsets = [0, 24], sizes = [8, 8], strides = [1, 1]} : vector<16x96xf32> to vector<8x8xf32>
    %216 = vector.extract_strided_slice %211 {offsets = [8, 0], sizes = [8, 8], strides = [1, 1]} : vector<16x96xf32> to vector<8x8xf32>
    %217 = vector.extract_strided_slice %211 {offsets = [8, 8], sizes = [8, 8], strides = [1, 1]} : vector<16x96xf32> to vector<8x8xf32>
    %218 = vector.extract_strided_slice %211 {offsets = [8, 16], sizes = [8, 8], strides = [1, 1]} : vector<16x96xf32> to vector<8x8xf32>
    %219 = vector.extract_strided_slice %211 {offsets = [8, 24], sizes = [8, 8], strides = [1, 1]} : vector<16x96xf32> to vector<8x8xf32>
    %220 = vector.shape_cast %212 : vector<8x8xf32> to vector<1x8x8xf32>
    %221 = vector.shape_cast %213 : vector<8x8xf32> to vector<1x8x8xf32>
    %222 = vector.shape_cast %214 : vector<8x8xf32> to vector<1x8x8xf32>
    %223 = vector.shape_cast %215 : vector<8x8xf32> to vector<1x8x8xf32>
    %224 = vector.shape_cast %216 : vector<8x8xf32> to vector<1x8x8xf32>
    %225 = vector.shape_cast %217 : vector<8x8xf32> to vector<1x8x8xf32>
    %226 = vector.shape_cast %218 : vector<8x8xf32> to vector<1x8x8xf32>
    %227 = vector.shape_cast %219 : vector<8x8xf32> to vector<1x8x8xf32>
    %228 = tpu.concatenate %220, %221, %222, %223, %224, %225, %226, %227 in 0 : vector<1x8x8xf32>, vector<1x8x8xf32>, vector<1x8x8xf32>, vector<1x8x8xf32>, vector<1x8x8xf32>, vector<1x8x8xf32>, vector<1x8x8xf32>, vector<1x8x8xf32> -> vector<8x8x8xf32>
    %cst_38 = arith.constant 0.353553385 : f32
    %229 = vector.broadcast %cst_38 : f32 to vector<8x8x8xf32>
    %230 = arith.mulf %228, %229 : vector<8x8x8xf32>
    %231 = vector.extract_strided_slice %211 {offsets = [0, 32], sizes = [8, 8], strides = [1, 1]} : vector<16x96xf32> to vector<8x8xf32>
    %232 = vector.extract_strided_slice %211 {offsets = [0, 40], sizes = [8, 8], strides = [1, 1]} : vector<16x96xf32> to vector<8x8xf32>
    %233 = vector.extract_strided_slice %211 {offsets = [0, 48], sizes = [8, 8], strides = [1, 1]} : vector<16x96xf32> to vector<8x8xf32>
    %234 = vector.extract_strided_slice %211 {offsets = [0, 56], sizes = [8, 8], strides = [1, 1]} : vector<16x96xf32> to vector<8x8xf32>
    %235 = vector.extract_strided_slice %211 {offsets = [8, 32], sizes = [8, 8], strides = [1, 1]} : vector<16x96xf32> to vector<8x8xf32>
    %236 = vector.extract_strided_slice %211 {offsets = [8, 40], sizes = [8, 8], strides = [1, 1]} : vector<16x96xf32> to vector<8x8xf32>
    %237 = vector.extract_strided_slice %211 {offsets = [8, 48], sizes = [8, 8], strides = [1, 1]} : vector<16x96xf32> to vector<8x8xf32>
    %238 = vector.extract_strided_slice %211 {offsets = [8, 56], sizes = [8, 8], strides = [1, 1]} : vector<16x96xf32> to vector<8x8xf32>
    %239 = vector.shape_cast %231 : vector<8x8xf32> to vector<1x8x8xf32>
    %240 = vector.shape_cast %232 : vector<8x8xf32> to vector<1x8x8xf32>
    %241 = vector.shape_cast %233 : vector<8x8xf32> to vector<1x8x8xf32>
    %242 = vector.shape_cast %234 : vector<8x8xf32> to vector<1x8x8xf32>
    %243 = vector.shape_cast %235 : vector<8x8xf32> to vector<1x8x8xf32>
    %244 = vector.shape_cast %236 : vector<8x8xf32> to vector<1x8x8xf32>
    %245 = vector.shape_cast %237 : vector<8x8xf32> to vector<1x8x8xf32>
    %246 = vector.shape_cast %238 : vector<8x8xf32> to vector<1x8x8xf32>
    %247 = tpu.concatenate %239, %240, %241, %242, %243, %244, %245, %246 in 0 : vector<1x8x8xf32>, vector<1x8x8xf32>, vector<1x8x8xf32>, vector<1x8x8xf32>, vector<1x8x8xf32>, vector<1x8x8xf32>, vector<1x8x8xf32>, vector<1x8x8xf32> -> vector<8x8x8xf32>
    %248 = vector.extract_strided_slice %211 {offsets = [0, 64], sizes = [8, 8], strides = [1, 1]} : vector<16x96xf32> to vector<8x8xf32>
    %249 = vector.extract_strided_slice %211 {offsets = [0, 72], sizes = [8, 8], strides = [1, 1]} : vector<16x96xf32> to vector<8x8xf32>
    %250 = vector.extract_strided_slice %211 {offsets = [0, 80], sizes = [8, 8], strides = [1, 1]} : vector<16x96xf32> to vector<8x8xf32>
    %251 = vector.extract_strided_slice %211 {offsets = [0, 88], sizes = [8, 8], strides = [1, 1]} : vector<16x96xf32> to vector<8x8xf32>
    %252 = vector.extract_strided_slice %211 {offsets = [8, 64], sizes = [8, 8], strides = [1, 1]} : vector<16x96xf32> to vector<8x8xf32>
    %253 = vector.extract_strided_slice %211 {offsets = [8, 72], sizes = [8, 8], strides = [1, 1]} : vector<16x96xf32> to vector<8x8xf32>
    %254 = vector.extract_strided_slice %211 {offsets = [8, 80], sizes = [8, 8], strides = [1, 1]} : vector<16x96xf32> to vector<8x8xf32>
    %255 = vector.extract_strided_slice %211 {offsets = [8, 88], sizes = [8, 8], strides = [1, 1]} : vector<16x96xf32> to vector<8x8xf32>
    %256 = vector.shape_cast %248 : vector<8x8xf32> to vector<1x8x8xf32>
    %257 = vector.shape_cast %249 : vector<8x8xf32> to vector<1x8x8xf32>
    %258 = vector.shape_cast %250 : vector<8x8xf32> to vector<1x8x8xf32>
    %259 = vector.shape_cast %251 : vector<8x8xf32> to vector<1x8x8xf32>
    %260 = vector.shape_cast %252 : vector<8x8xf32> to vector<1x8x8xf32>
    %261 = vector.shape_cast %253 : vector<8x8xf32> to vector<1x8x8xf32>
    %262 = vector.shape_cast %254 : vector<8x8xf32> to vector<1x8x8xf32>
    %263 = vector.shape_cast %255 : vector<8x8xf32> to vector<1x8x8xf32>
    %264 = tpu.concatenate %256, %257, %258, %259, %260, %261, %262, %263 in 0 : vector<1x8x8xf32>, vector<1x8x8xf32>, vector<1x8x8xf32>, vector<1x8x8xf32>, vector<1x8x8xf32>, vector<1x8x8xf32>, vector<1x8x8xf32>, vector<1x8x8xf32> -> vector<8x8x8xf32>
    %cst_39 = arith.constant dense<0.000000e+00> : vector<8x8x8xf32>
    %265 = tpu.matmul %230, %247, %cst_39 {dimension_numbers = #tpu.dot_dimension_numbers<[2], [2], [1], [1], [0, 0, 0, 1, 1, 1], [0], [0]>} : vector<8x8x8xf32>, vector<8x8x8xf32>, vector<8x8x8xf32> -> vector<8x8x8xf32>
    %cst_40 = arith.constant dense<0xFF800000> : vector<8x8xf32>
    %266 = vector.multi_reduction <maximumf>, %265, %cst_40 [2] : vector<8x8x8xf32> to vector<8x8xf32>
    %267 = vector.shape_cast %266 : vector<8x8xf32> to vector<8x8x1xf32>
    %268 = vector.broadcast %267 : vector<8x8x1xf32> to vector<8x8x8xf32>
    %269 = arith.subf %265, %268 : vector<8x8x8xf32>
    %270 = math.exp %269 : vector<8x8x8xf32>
    %cst_41 = arith.constant dense<0.000000e+00> : vector<8x8xf32>
    %271 = vector.multi_reduction <add>, %270, %cst_41 [2] : vector<8x8x8xf32> to vector<8x8xf32>
    %272 = vector.shape_cast %271 : vector<8x8xf32> to vector<8x8x1xf32>
    %273 = tpu.reciprocal %272 {approx = true} : vector<8x8x1xf32> -> vector<8x8x1xf32>
    %274 = vector.broadcast %273 : vector<8x8x1xf32> to vector<8x8x8xf32>
    %275 = arith.mulf %270, %274 : vector<8x8x8xf32>
    %cst_42 = arith.constant dense<0.000000e+00> : vector<8x8x8xf32>
    %276 = tpu.matmul %275, %264, %cst_42 {dimension_numbers = #tpu.dot_dimension_numbers<[2], [1], [1], [2], [0, 0, 0, 1, 1, 2], [0], [0]>} : vector<8x8x8xf32>, vector<8x8x8xf32>, vector<8x8x8xf32> -> vector<8x8x8xf32>
    %277 = vector.extract_strided_slice %276 {offsets = [0, 0, 0], sizes = [1, 8, 8], strides = [1, 1, 1]} : vector<8x8x8xf32> to vector<1x8x8xf32>
    %278 = vector.shape_cast %277 : vector<1x8x8xf32> to vector<8x8xf32>
    %279 = vector.extract_strided_slice %276 {offsets = [1, 0, 0], sizes = [1, 8, 8], strides = [1, 1, 1]} : vector<8x8x8xf32> to vector<1x8x8xf32>
    %280 = vector.shape_cast %279 : vector<1x8x8xf32> to vector<8x8xf32>
    %281 = vector.extract_strided_slice %276 {offsets = [2, 0, 0], sizes = [1, 8, 8], strides = [1, 1, 1]} : vector<8x8x8xf32> to vector<1x8x8xf32>
    %282 = vector.shape_cast %281 : vector<1x8x8xf32> to vector<8x8xf32>
    %283 = vector.extract_strided_slice %276 {offsets = [3, 0, 0], sizes = [1, 8, 8], strides = [1, 1, 1]} : vector<8x8x8xf32> to vector<1x8x8xf32>
    %284 = vector.shape_cast %283 : vector<1x8x8xf32> to vector<8x8xf32>
    %285 = tpu.concatenate %278, %280, %282, %284 in 1 : vector<8x8xf32>, vector<8x8xf32>, vector<8x8xf32>, vector<8x8xf32> -> vector<8x32xf32>
    %286 = vector.extract_strided_slice %276 {offsets = [4, 0, 0], sizes = [1, 8, 8], strides = [1, 1, 1]} : vector<8x8x8xf32> to vector<1x8x8xf32>
    %287 = vector.shape_cast %286 : vector<1x8x8xf32> to vector<8x8xf32>
    %288 = vector.extract_strided_slice %276 {offsets = [5, 0, 0], sizes = [1, 8, 8], strides = [1, 1, 1]} : vector<8x8x8xf32> to vector<1x8x8xf32>
    %289 = vector.shape_cast %288 : vector<1x8x8xf32> to vector<8x8xf32>
    %290 = vector.extract_strided_slice %276 {offsets = [6, 0, 0], sizes = [1, 8, 8], strides = [1, 1, 1]} : vector<8x8x8xf32> to vector<1x8x8xf32>
    %291 = vector.shape_cast %290 : vector<1x8x8xf32> to vector<8x8xf32>
    %292 = vector.extract_strided_slice %276 {offsets = [7, 0, 0], sizes = [1, 8, 8], strides = [1, 1, 1]} : vector<8x8x8xf32> to vector<1x8x8xf32>
    %293 = vector.shape_cast %292 : vector<1x8x8xf32> to vector<8x8xf32>
    %294 = tpu.concatenate %287, %289, %291, %293 in 1 : vector<8x8xf32>, vector<8x8xf32>, vector<8x8xf32>, vector<8x8xf32> -> vector<8x32xf32>
    %295 = tpu.concatenate %285, %294 in 0 : vector<8x32xf32>, vector<8x32xf32> -> vector<16x32xf32>
    %cst_43 = arith.constant dense<0.000000e+00> : vector<16x32xf32>
    %296 = tpu.matmul %295, %207, %cst_43 {dimension_numbers = #tpu.dot_dimension_numbers<[1], [0], [0], [1], [0, 0, 1, 1], [], []>} : vector<16x32xf32>, vector<32x32xf32>, vector<16x32xf32> -> vector<16x32xf32>
    %297 = vector.broadcast %200 : vector<1x32xf32> to vector<16x32xf32>
    %298 = arith.addf %296, %297 : vector<16x32xf32>
    %299 = arith.addf %195, %298 : vector<16x32xf32>
    %cst_44 = arith.constant dense<0.000000e+00> : vector<16xf32>
    %300 = vector.multi_reduction <add>, %299, %cst_44 [1] : vector<16x32xf32> to vector<16xf32>
    %301 = vector.shape_cast %300 : vector<16xf32> to vector<16x1xf32>
    %302 = arith.mulf %299, %299 : vector<16x32xf32>
    %cst_45 = arith.constant dense<0.000000e+00> : vector<16xf32>
    %303 = vector.multi_reduction <add>, %302, %cst_45 [1] : vector<16x32xf32> to vector<16xf32>
    %304 = vector.shape_cast %303 : vector<16xf32> to vector<16x1xf32>
    %cst_46 = arith.constant 3.125000e-02 : f32
    %305 = vector.broadcast %cst_46 : f32 to vector<16x1xf32>
    %306 = arith.mulf %301, %305 : vector<16x1xf32>
    %cst_47 = arith.constant 3.125000e-02 : f32
    %307 = vector.broadcast %cst_47 : f32 to vector<16x1xf32>
    %308 = arith.mulf %304, %307 : vector<16x1xf32>
    %309 = arith.mulf %306, %306 : vector<16x1xf32>
    %310 = arith.subf %308, %309 : vector<16x1xf32>
    %cst_48 = arith.constant 9.99999996E-13 : f32
    %311 = vector.broadcast %cst_48 : f32 to vector<16x1xf32>
    %312 = arith.addf %310, %311 : vector<16x1xf32>
    %313 = math.rsqrt %312 : vector<16x1xf32>
    %314 = vector.broadcast %306 : vector<16x1xf32> to vector<16x32xf32>
    %315 = arith.subf %299, %314 : vector<16x32xf32>
    %316 = vector.broadcast %313 : vector<16x1xf32> to vector<16x32xf32>
    %317 = arith.mulf %315, %316 : vector<16x32xf32>
    %318 = vector.broadcast %201 : vector<1x32xf32> to vector<16x32xf32>
    %319 = arith.mulf %317, %318 : vector<16x32xf32>
    %320 = vector.broadcast %202 : vector<1x32xf32> to vector<16x32xf32>
    %321 = arith.addf %319, %320 : vector<16x32xf32>
    %322 = arith.truncf %321 : vector<16x32xf32> to vector<16x32xbf16>
    %cst_49 = arith.constant dense<0.000000e+00> : vector<16x64xf32>
    %323 = tpu.matmul %322, %197, %cst_49 {dimension_numbers = #tpu.dot_dimension_numbers<[1], [0], [0], [1], [0, 0, 1, 1], [], []>} : vector<16x32xbf16>, vector<32x64xbf16>, vector<16x64xf32> -> vector<16x64xf32>
    %324 = vector.broadcast %203 : vector<1x64xf32> to vector<16x64xf32>
    %325 = arith.addf %323, %324 : vector<16x64xf32>
    %cst_50 = arith.constant 5.000000e-01 : f32
    %326 = vector.broadcast %cst_50 : f32 to vector<16x64xf32>
    %327 = arith.mulf %326, %325 : vector<16x64xf32>
    %cst_51 = arith.constant 4.471500e-02 : f32
    %328 = vector.broadcast %cst_51 : f32 to vector<16x64xf32>
    %329 = arith.mulf %328, %325 : vector<16x64xf32>
    %330 = arith.mulf %329, %325 : vector<16x64xf32>
    %331 = arith.mulf %330, %325 : vector<16x64xf32>
    %332 = arith.addf %325, %331 : vector<16x64xf32>
    %cst_52 = arith.constant 0.797884583 : f32
    %333 = vector.broadcast %cst_52 : f32 to vector<16x64xf32>
    %334 = arith.mulf %333, %332 : vector<16x64xf32>
    %335 = math.tanh %334 : vector<16x64xf32>
    %cst_53 = arith.constant 1.000000e+00 : f32
    %336 = vector.broadcast %cst_53 : f32 to vector<16x64xf32>
    %337 = arith.addf %336, %335 : vector<16x64xf32>
    %338 = arith.mulf %327, %337 : vector<16x64xf32>
    %339 = arith.truncf %338 : vector<16x64xf32> to vector<16x64xbf16>
    %cst_54 = arith.constant dense<0.000000e+00> : vector<16x32xf32>
    %340 = tpu.matmul %339, %198, %cst_54 {dimension_numbers = #tpu.dot_dimension_numbers<[1], [0], [0], [1], [0, 0, 1, 1], [], []>} : vector<16x64xbf16>, vector<64x32xbf16>, vector<16x32xf32> -> vector<16x32xf32>
    %341 = vector.broadcast %204 : vector<1x32xf32> to vector<16x32xf32>
    %342 = arith.addf %340, %341 : vector<16x32xf32>
    %343 = arith.addf %321, %342 : vector<16x32xf32>
    %cst_55 = arith.constant dense<0.000000e+00> : vector<16xf32>
    %344 = vector.multi_reduction <add>, %343, %cst_55 [1] : vector<16x32xf32> to vector<16xf32>
    %345 = vector.shape_cast %344 : vector<16xf32> to vector<16x1xf32>
    %346 = arith.mulf %343, %343 : vector<16x32xf32>
    %cst_56 = arith.constant dense<0.000000e+00> : vector<16xf32>
    %347 = vector.multi_reduction <add>, %346, %cst_56 [1] : vector<16x32xf32> to vector<16xf32>
    %348 = vector.shape_cast %347 : vector<16xf32> to vector<16x1xf32>
    %cst_57 = arith.constant 3.125000e-02 : f32
    %349 = vector.broadcast %cst_57 : f32 to vector<16x1xf32>
    %350 = arith.mulf %345, %349 : vector<16x1xf32>
    %cst_58 = arith.constant 3.125000e-02 : f32
    %351 = vector.broadcast %cst_58 : f32 to vector<16x1xf32>
    %352 = arith.mulf %348, %351 : vector<16x1xf32>
    %353 = arith.mulf %350, %350 : vector<16x1xf32>
    %354 = arith.subf %352, %353 : vector<16x1xf32>
    %cst_59 = arith.constant 9.99999996E-13 : f32
    %355 = vector.broadcast %cst_59 : f32 to vector<16x1xf32>
    %356 = arith.addf %354, %355 : vector<16x1xf32>
    %357 = math.rsqrt %356 : vector<16x1xf32>
    %358 = vector.broadcast %350 : vector<16x1xf32> to vector<16x32xf32>
    %359 = arith.subf %343, %358 : vector<16x32xf32>
    %360 = vector.broadcast %357 : vector<16x1xf32> to vector<16x32xf32>
    %361 = arith.mulf %359, %360 : vector<16x32xf32>
    %362 = vector.broadcast %205 : vector<1x32xf32> to vector<16x32xf32>
    %363 = arith.mulf %361, %362 : vector<16x32xf32>
    %364 = vector.broadcast %206 : vector<1x32xf32> to vector<16x32xf32>
    %365 = arith.addf %363, %364 : vector<16x32xf32>
    %366 = arith.addf %195, %365 : vector<16x32xf32>
    %c0_60 = arith.constant 0 : index
    %c0_61 = arith.constant 0 : index
    %367 = vector.load %arg3[%c0_60, %c0_61] : memref<16x32xf32, #tpu.memory_space<vmem>>, vector<16x32xf32>
    tpu.vector_store %arg3[%c0_60, %c0_61], %366 {strides = array<i32>} : memref<16x32xf32, #tpu.memory_space<vmem>>, vector<16x32xf32>,
    return
  }
}

</mosaic_0001>

<llo_original>
// kernel: bert_mid_layer_forward.1
$region0: #{bert_mid_layer_forward.1}
  #allocation0 [shape = 'u32[]', space=smem, size = 0x4, offset = 0x4, fixed_abs, tag = 'smem constant byte address 0x4 - core index']
  #allocation1 [shape = 'u32[72,128]{1,0:T(1,128)}', space=vmem, size = 0x9000, scoped, tag = 'internal scratch']
  %s0 = inlined_call_operand.vmem [shape: f32[16,32], index: 0, kind: input, shape index: {}]
  %s1 = inlined_call_operand.vmem [shape: bf16[256,128], index: 1, kind: input, shape index: {}]
  %s2 = inlined_call_operand.hbm [shape: f32[88,128], index: 2, kind: input, shape index: {}]
  %s3 = inlined_call_operand.hbm [shape: f32[16,32], index: 3, kind: output, shape index: {}]
  %s4 = sld [smem:[#allocation0]]
  $region26: #{bert_mid_layer_forward.1} parent=0
    _
  %s6 = ssub.s32 1, %s4
  %s7 = scalar_select 0, %s6, %s4
  $region1: #{bert_mid_layer_forward.1} parent=0
    #allocation2 [shape = 'u8[45056]{0}', space=vmem, size = 0xb000, scoped, tag = 'input window, operand 2, single buffered']
    #allocation3 [shape = 's32[1]{0}', space=sflag, size = 0x4, scoped, tag = 'scoped memory for bert_mid_layer_forward.1']
    #allocation4 [shape = 's32[1]{0}', space=sflag, size = 0x4, scoped, tag = 'scoped memory for bert_mid_layer_forward.1']
    #allocation5 [shape = 'u8[8192]{0}', space=vmem, size = 0x2000, scoped, tag = 'output window, operand 0, single buffered']
    %8 = vsyncpa [#allocation3], 0
    %9 = vsyncpa [#allocation4], 0
    // Predicated region
    $region2: #{bert_mid_layer_forward.1} parent=1 // pred_check
      _
    $region3: #{bert_mid_layer_forward.1} parent=1 // pred_check_branch
      %11 = sbr.rel (0) target = $region5
    $region4: #{bert_mid_layer_forward.1} parent=1 // pred_region
      _
    $region5: #{bert_mid_layer_forward.1} parent=1 // pred_fallthru
      _
    // Predicated region
    $region6: #{bert_mid_layer_forward.1} parent=1 // pred_check
      _
    $region7: #{bert_mid_layer_forward.1} parent=1 // pred_check_branch
      %13 = sbr.rel (0) target = $region9
    $region8: #{bert_mid_layer_forward.1} parent=1 // pred_region
      _
    $region9: #{bert_mid_layer_forward.1} parent=1 // pred_fallthru
      _
    // Predicated region
    $region10: #{bert_mid_layer_forward.1} parent=1 // pred_check
      _
    $region11: #{bert_mid_layer_forward.1} parent=1 // pred_check_branch
      %15 = sbr.rel (0) target = $region13
    $region12: #{bert_mid_layer_forward.1} parent=1 // pred_region
      %17 = vsyncadd [#allocation3], 0
      %s18 = sshll.u32 %s2, 4
      %s19 = int_to_ptr.hbm [resolvable:$true] %s18
      %s20 = sshll.u32 [#allocation2], 4
      %s21 = int_to_ptr.vmem [resolvable:$true] %s20
      %26 = dma.hbm_to_vmem [thread:$0]  %s19, 1408, %s21, [#allocation3], 128, 128, 8
    $region13: #{bert_mid_layer_forward.1} parent=1 // pred_fallthru
      _
    // Predicated region
    $region14: #{bert_mid_layer_forward.1} parent=1 // pred_check
      _
    $region15: #{bert_mid_layer_forward.1} parent=1 // pred_check_branch
      %28 = sbr.rel (0) target = $region17
    $region16: #{bert_mid_layer_forward.1} parent=1 // pred_region
      %30 = dma.done [#allocation3], 1408
    $region17: #{bert_mid_layer_forward.1} parent=1 // pred_fallthru
      _
    %v32 = vld [vmem:[#allocation2] sm:$0xff]
    %v33 = vld [vmem:[#allocation2 + $0x8] sm:$0xff]
    %v34 = vld [vmem:[#allocation2 + $0x10] sm:$0xff]
    %v35 = vld [vmem:[#allocation2 + $0x18] sm:$0xff]
    %v36 = vld [vmem:[#allocation2 + $0x20] sm:$0xff]
    %v37 = vld [vmem:[#allocation2 + $0x28] sm:$0xff]
    %v38 = vld [vmem:[#allocation2 + $0x30] sm:$0xff]
    %v39 = vld [vmem:[#allocation2 + $0x38] sm:$0xff]
    %v40 = vld [vmem:[#allocation2 + $0x40] sm:$0xff]
    %v41 = vld [vmem:[#allocation2 + $0x48] sm:$0xff]
    %v42 = vld [vmem:[#allocation2 + $0x50] sm:$0xff]
    %v43 = vld [vmem:[%s0] sm:$0xff]
    %v44 = vld [vmem:[%s0 + $0x8] sm:$0xff]
    %vm45 = vcmask 261120
    %v46 = vsel %vm45, %v43, 0.0
    %47 = vadd.xlane.f32.xlu0 %v46
    %v48 = vpop.xlane.xlu0 %47
    %v49 = vsel %vm45, %v44, 0.0
    %50 = vadd.xlane.f32.xlu0 %v49
    %v51 = vpop.xlane.xlu0 %50
    %v52 = vmul.f32 %v43, %v43
    %v53 = vmul.f32 %v44, %v44
    %v54 = vsel %vm45, %v52, 0.0
    %55 = vadd.xlane.f32.xlu0 %v54
    %v56 = vpop.xlane.xlu0 %55
    %v57 = vsel %vm45, %v53, 0.0
    %58 = vadd.xlane.f32.xlu0 %v57
    %v59 = vpop.xlane.xlu0 %58
    %v60 = vmul.f32 %v48, 0.03125
    %v61 = vmul.f32 %v51, 0.03125
    %v62 = vmul.f32 %v56, 0.03125
    %v63 = vmul.f32 %v59, 0.03125
    %v64 = vmul.f32 %v60, %v60
    %v65 = vmul.f32 %v61, %v61
    %v66 = vsub.f32 %v62, %v64
    %v67 = vsub.f32 %v63, %v65
    %v68 = vadd.f32 %v66, 1e-12
    %v69 = vadd.f32 %v67, 1e-12
    %v70 = vrsqrt.pop %v68
    %v71 = vmul.f32 %v70, %v68
    %v72 = vmul.f32 %v71, %v70
    %v73 = vmul.f32 0.5, %v72
    %v74 = vsub.f32 1.5, %v73
    %v75 = vmul.f32 %v70, %v74
    %vm76 = vweird.f32 %v68
    %vm77 = vweird.f32 %v70
    %vm78 = vmor %vm76, %vm77
    %v79 = vsel %vm78, %v70, %v75
    %v80 = vrsqrt.pop %v69
    %v81 = vmul.f32 %v80, %v69
    %v82 = vmul.f32 %v81, %v80
    %v83 = vmul.f32 0.5, %v82
    %v84 = vsub.f32 1.5, %v83
    %v85 = vmul.f32 %v80, %v84
    %vm86 = vweird.f32 %v69
    %vm87 = vweird.f32 %v80
    %vm88 = vmor %vm86, %vm87
    %v89 = vsel %vm88, %v80, %v85
    %v90 = vsub.f32 %v43, %v60
    %v91 = vsub.f32 %v44, %v61
    %v92 = vmul.f32 %v90, %v79
    %v93 = vmul.f32 %v91, %v89
    %v94 = vperm.slane %v32, 0
    %v95 = vmul.f32 %v92, %v94
    %v96 = vmul.f32 %v93, %v94
    %v97 = vperm.slane %v32, 1
    %v98 = vadd.f32 %v95, %v97
    %v99 = vadd.f32 %v96, %v97
    %v100 = vld [vmem:[%s1] sm:$0xf]
    %v101 = vld [vmem:[%s1 + $0x4] sm:$0xf]
    %v102 = vld [vmem:[%s1 + $0x8] sm:$0xf]
    %v103 = vld [vmem:[%s1 + $0xc] sm:$0xf]
    %v104 = vld [vmem:[%s1 + $0x10] sm:$0xf]
    %v105 = vld [vmem:[%s1 + $0x14] sm:$0xf]
    %v106 = vld [vmem:[%s1 + $0x18] sm:$0xf]
    %v107 = vld [vmem:[%s1 + $0x1c] sm:$0xf]
    %v108 = vld [vmem:[%s1 + $0x20] sm:$0xf]
    %v109 = vld [vmem:[%s1 + $0x24] sm:$0xf]
    %v110 = vld [vmem:[%s1 + $0x28] sm:$0xf]
    %v111 = vld [vmem:[%s1 + $0x2c] sm:$0xf]
    %v112 = vld [vmem:[%s1 + $0x30] sm:$0xf]
    %v113 = vld [vmem:[%s1 + $0x34] sm:$0xf]
    %v114 = vld [vmem:[%s1 + $0x38] sm:$0xf]
    %v115 = vld [vmem:[%s1 + $0x3c] sm:$0xf]
    %v116 = vpack.c.bf16 %v99, %v98
    %v117 = vperm.slane %v33, 0
    %v122 = vunpack.c.l.b16 %v100
    %v123 = vunpack.c.l.b16 %v101
    %v124 = vunpack.c.l.b16 %v102
    %v125 = vunpack.c.l.b16 %v103
    %v126 = vpack.c.b16 %v123, %v122
    %v127 = vpack.c.b16 %v125, %v124
    %v131 = vsel %vm45, %v116, 0
    %133 = vmatpush.bf16.msra.mxu0 0
    %134 = vmatpush.bf16.msra.mxu0 0
    %135 = vmatpush.bf16.msra.mxu0 0
    %136 = vmatpush.bf16.msra.mxu0 0
    %137 = vmatpush.bf16.msra.mxu0 0
    %138 = vmatpush.bf16.msra.mxu0 0
    %139 = vmatpush.bf16.msra.mxu0 %v127
    %140 = vmatpush.bf16.msra.mxu0 %v126
    %141 = vmatmul.bf16.gmra.mxu0 %v131
    %v142 = vpop.f32.mrf.mxu0
    %v143 = vadd.f32 %v117, %v142
    %v144 = vpop.f32.mrf.mxu0
    %v145 = vadd.f32 %v117, %v144
    %146 = vdwg.mxu0
    %148 = vrot.lane.b32.xlu0 %v143, 120
    %v149 = vpop.permute.xlu0 %148
    %151 = vrot.lane.b32.xlu0 %v143, 112
    %v152 = vpop.permute.xlu0 %151
    %154 = vrot.lane.b32.xlu0 %v143, 104
    %v155 = vpop.permute.xlu0 %154
    %158 = vrot.lane.b32.xlu0 %v145, 120
    %v159 = vpop.permute.xlu0 %158
    %161 = vrot.lane.b32.xlu0 %v145, 112
    %v162 = vpop.permute.xlu0 %161
    %164 = vrot.lane.b32.xlu0 %v145, 104
    %v165 = vpop.permute.xlu0 %164
    %v167 = vmul.f32 %v143, 0.35355338
    %v168 = vmul.f32 %v149, 0.35355338
    %v169 = vmul.f32 %v152, 0.35355338
    %v170 = vmul.f32 %v155, 0.35355338
    %v171 = vmul.f32 %v145, 0.35355338
    %v172 = vmul.f32 %v159, 0.35355338
    %v173 = vmul.f32 %v162, 0.35355338
    %v174 = vmul.f32 %v165, 0.35355338
    %175 = vrot.lane.b32.xlu0 %v143, 96
    %v176 = vpop.permute.xlu0 %175
    %vm177 = vcmask 64512
    %v179 = vsel %vm177, %v167, 0
    %v181 = vsel %vm177, %v176, 0
    %183 = vmatpush.xpose.msra.mxu0 0.0
    %184 = vmatpush.xpose.msra.mxu0 0.0
    %185 = vmatpush.xpose.msra.mxu0 0.0
    %186 = vmatpush.xpose.msra.mxu0 0.0
    %187 = vmatpush.xpose.msra.mxu0 0.0
    %188 = vmatpush.xpose.msra.mxu0 0.0
    %189 = vmatpush.xpose.msra.mxu0 0.0
    %190 = vmatpush.xpose.msra.mxu0 0.0
    %191 = vmatpush.xpose.msra.mxu0 0.0
    %192 = vmatpush.xpose.msra.mxu0 0.0
    %193 = vmatpush.xpose.msra.mxu0 0.0
    %194 = vmatpush.xpose.msra.mxu0 0.0
    %195 = vmatpush.xpose.msra.mxu0 0.0
    %196 = vmatpush.xpose.msra.mxu0 0.0
    %197 = vmatpush.xpose.msra.mxu0 0.0
    %198 = vmatpush.xpose.msra.mxu0 %v181
    %199 = vmatmul.f32.gmra.mxu0 %v179
    %v200 = vpop.f32.mrf.mxu0
    %v201 = vadd.f32 0.0, %v200
    %202 = vdwg.mxu0
    %203 = vrot.lane.b32.xlu0 %v149, 96
    %v204 = vpop.permute.xlu0 %203
    %v206 = vsel %vm177, %v168, 0
    %v208 = vsel %vm177, %v204, 0
    %210 = vmatpush.xpose.msra.mxu0 0.0
    %211 = vmatpush.xpose.msra.mxu0 0.0
    %212 = vmatpush.xpose.msra.mxu0 0.0
    %213 = vmatpush.xpose.msra.mxu0 0.0
    %214 = vmatpush.xpose.msra.mxu0 0.0
    %215 = vmatpush.xpose.msra.mxu0 0.0
    %216 = vmatpush.xpose.msra.mxu0 0.0
    %217 = vmatpush.xpose.msra.mxu0 0.0
    %218 = vmatpush.xpose.msra.mxu0 0.0
    %219 = vmatpush.xpose.msra.mxu0 0.0
    %220 = vmatpush.xpose.msra.mxu0 0.0
    %221 = vmatpush.xpose.msra.mxu0 0.0
    %222 = vmatpush.xpose.msra.mxu0 0.0
    %223 = vmatpush.xpose.msra.mxu0 0.0
    %224 = vmatpush.xpose.msra.mxu0 0.0
    %225 = vmatpush.xpose.msra.mxu0 %v208
    %226 = vmatmul.f32.gmra.mxu0 %v206
    %v227 = vpop.f32.mrf.mxu0
    %v228 = vadd.f32 0.0, %v227
    %229 = vdwg.mxu0
    %230 = vrot.lane.b32.xlu0 %v152, 96
    %v231 = vpop.permute.xlu0 %230
    %v233 = vsel %vm177, %v169, 0
    %v235 = vsel %vm177, %v231, 0
    %237 = vmatpush.xpose.msra.mxu0 0.0
    %238 = vmatpush.xpose.msra.mxu0 0.0
    %239 = vmatpush.xpose.msra.mxu0 0.0
    %240 = vmatpush.xpose.msra.mxu0 0.0
    %241 = vmatpush.xpose.msra.mxu0 0.0
    %242 = vmatpush.xpose.msra.mxu0 0.0
    %243 = vmatpush.xpose.msra.mxu0 0.0
    %244 = vmatpush.xpose.msra.mxu0 0.0
    %245 = vmatpush.xpose.msra.mxu0 0.0
    %246 = vmatpush.xpose.msra.mxu0 0.0
    %247 = vmatpush.xpose.msra.mxu0 0.0
    %248 = vmatpush.xpose.msra.mxu0 0.0
    %249 = vmatpush.xpose.msra.mxu0 0.0
    %250 = vmatpush.xpose.msra.mxu0 0.0
    %251 = vmatpush.xpose.msra.mxu0 0.0
    %252 = vmatpush.xpose.msra.mxu0 %v235
    %253 = vmatmul.f32.gmra.mxu0 %v233
    %v254 = vpop.f32.mrf.mxu0
    %v255 = vadd.f32 0.0, %v254
    %256 = vdwg.mxu0
    %257 = vrot.lane.b32.xlu0 %v155, 96
    %v258 = vpop.permute.xlu0 %257
    %v260 = vsel %vm177, %v170, 0
    %v262 = vsel %vm177, %v258, 0
    %264 = vmatpush.xpose.msra.mxu0 0.0
    %265 = vmatpush.xpose.msra.mxu0 0.0
    %266 = vmatpush.xpose.msra.mxu0 0.0
    %267 = vmatpush.xpose.msra.mxu0 0.0
    %268 = vmatpush.xpose.msra.mxu0 0.0
    %269 = vmatpush.xpose.msra.mxu0 0.0
    %270 = vmatpush.xpose.msra.mxu0 0.0
    %271 = vmatpush.xpose.msra.mxu0 0.0
    %272 = vmatpush.xpose.msra.mxu0 0.0
    %273 = vmatpush.xpose.msra.mxu0 0.0
    %274 = vmatpush.xpose.msra.mxu0 0.0
    %275 = vmatpush.xpose.msra.mxu0 0.0
    %276 = vmatpush.xpose.msra.mxu0 0.0
    %277 = vmatpush.xpose.msra.mxu0 0.0
    %278 = vmatpush.xpose.msra.mxu0 0.0
    %279 = vmatpush.xpose.msra.mxu0 %v262
    %280 = vmatmul.f32.gmra.mxu0 %v260
    %v281 = vpop.f32.mrf.mxu0
    %v282 = vadd.f32 0.0, %v281
    %283 = vdwg.mxu0
    %284 = vrot.lane.b32.xlu0 %v145, 96
    %v285 = vpop.permute.xlu0 %284
    %v287 = vsel %vm177, %v171, 0
    %v289 = vsel %vm177, %v285, 0
    %291 = vmatpush.xpose.msra.mxu0 0.0
    %292 = vmatpush.xpose.msra.mxu0 0.0
    %293 = vmatpush.xpose.msra.mxu0 0.0
    %294 = vmatpush.xpose.msra.mxu0 0.0
    %295 = vmatpush.xpose.msra.mxu0 0.0
    %296 = vmatpush.xpose.msra.mxu0 0.0
    %297 = vmatpush.xpose.msra.mxu0 0.0
    %298 = vmatpush.xpose.msra.mxu0 0.0
    %299 = vmatpush.xpose.msra.mxu0 0.0
    %300 = vmatpush.xpose.msra.mxu0 0.0
    %301 = vmatpush.xpose.msra.mxu0 0.0
    %302 = vmatpush.xpose.msra.mxu0 0.0
    %303 = vmatpush.xpose.msra.mxu0 0.0
    %304 = vmatpush.xpose.msra.mxu0 0.0
    %305 = vmatpush.xpose.msra.mxu0 0.0
    %306 = vmatpush.xpose.msra.mxu0 %v289
    %307 = vmatmul.f32.gmra.mxu0 %v287
    %v308 = vpop.f32.mrf.mxu0
    %v309 = vadd.f32 0.0, %v308
    %310 = vdwg.mxu0
    %311 = vrot.lane.b32.xlu0 %v159, 96
    %v312 = vpop.permute.xlu0 %311
    %v314 = vsel %vm177, %v172, 0
    %v316 = vsel %vm177, %v312, 0
    %318 = vmatpush.xpose.msra.mxu0 0.0
    %319 = vmatpush.xpose.msra.mxu0 0.0
    %320 = vmatpush.xpose.msra.mxu0 0.0
    %321 = vmatpush.xpose.msra.mxu0 0.0
    %322 = vmatpush.xpose.msra.mxu0 0.0
    %323 = vmatpush.xpose.msra.mxu0 0.0
    %324 = vmatpush.xpose.msra.mxu0 0.0
    %325 = vmatpush.xpose.msra.mxu0 0.0
    %326 = vmatpush.xpose.msra.mxu0 0.0
    %327 = vmatpush.xpose.msra.mxu0 0.0
    %328 = vmatpush.xpose.msra.mxu0 0.0
    %329 = vmatpush.xpose.msra.mxu0 0.0
    %330 = vmatpush.xpose.msra.mxu0 0.0
    %331 = vmatpush.xpose.msra.mxu0 0.0
    %332 = vmatpush.xpose.msra.mxu0 0.0
    %333 = vmatpush.xpose.msra.mxu0 %v316
    %334 = vmatmul.f32.gmra.mxu0 %v314
    %v335 = vpop.f32.mrf.mxu0
    %v336 = vadd.f32 0.0, %v335
    %337 = vdwg.mxu0
    %338 = vrot.lane.b32.xlu0 %v162, 96
    %v339 = vpop.permute.xlu0 %338
    %v341 = vsel %vm177, %v173, 0
    %v343 = vsel %vm177, %v339, 0
    %345 = vmatpush.xpose.msra.mxu0 0.0
    %346 = vmatpush.xpose.msra.mxu0 0.0
    %347 = vmatpush.xpose.msra.mxu0 0.0
    %348 = vmatpush.xpose.msra.mxu0 0.0
    %349 = vmatpush.xpose.msra.mxu0 0.0
    %350 = vmatpush.xpose.msra.mxu0 0.0
    %351 = vmatpush.xpose.msra.mxu0 0.0
    %352 = vmatpush.xpose.msra.mxu0 0.0
    %353 = vmatpush.xpose.msra.mxu0 0.0
    %354 = vmatpush.xpose.msra.mxu0 0.0
    %355 = vmatpush.xpose.msra.mxu0 0.0
    %356 = vmatpush.xpose.msra.mxu0 0.0
    %357 = vmatpush.xpose.msra.mxu0 0.0
    %358 = vmatpush.xpose.msra.mxu0 0.0
    %359 = vmatpush.xpose.msra.mxu0 0.0
    %360 = vmatpush.xpose.msra.mxu0 %v343
    %361 = vmatmul.f32.gmra.mxu0 %v341
    %v362 = vpop.f32.mrf.mxu0
    %v363 = vadd.f32 0.0, %v362
    %364 = vdwg.mxu0
    %365 = vrot.lane.b32.xlu0 %v165, 96
    %v366 = vpop.permute.xlu0 %365
    %v368 = vsel %vm177, %v174, 0
    %v370 = vsel %vm177, %v366, 0
    %372 = vmatpush.xpose.msra.mxu0 0.0
    %373 = vmatpush.xpose.msra.mxu0 0.0
    %374 = vmatpush.xpose.msra.mxu0 0.0
    %375 = vmatpush.xpose.msra.mxu0 0.0
    %376 = vmatpush.xpose.msra.mxu0 0.0
    %377 = vmatpush.xpose.msra.mxu0 0.0
    %378 = vmatpush.xpose.msra.mxu0 0.0
    %379 = vmatpush.xpose.msra.mxu0 0.0
    %380 = vmatpush.xpose.msra.mxu0 0.0
    %381 = vmatpush.xpose.msra.mxu0 0.0
    %382 = vmatpush.xpose.msra.mxu0 0.0
    %383 = vmatpush.xpose.msra.mxu0 0.0
    %384 = vmatpush.xpose.msra.mxu0 0.0
    %385 = vmatpush.xpose.msra.mxu0 0.0
    %386 = vmatpush.xpose.msra.mxu0 0.0
    %387 = vmatpush.xpose.msra.mxu0 %v370
    %388 = vmatmul.f32.gmra.mxu0 %v368
    %v389 = vpop.f32.mrf.mxu0
    %v390 = vadd.f32 0.0, %v389
    %391 = vdwg.mxu0
    %v392 = vsel %vm177, %v201, -inf
    %393 = vmax.xlane.f32.xlu0 %v392
    %v394 = vpop.xlane.xlu0 %393
    %v395 = vsel %vm177, %v228, -inf
    %396 = vmax.xlane.f32.xlu0 %v395
    %v397 = vpop.xlane.xlu0 %396
    %v398 = vsel %vm177, %v255, -inf
    %399 = vmax.xlane.f32.xlu0 %v398
    %v400 = vpop.xlane.xlu0 %399
    %v401 = vsel %vm177, %v282, -inf
    %402 = vmax.xlane.f32.xlu0 %v401
    %v403 = vpop.xlane.xlu0 %402
    %v404 = vsel %vm177, %v309, -inf
    %405 = vmax.xlane.f32.xlu0 %v404
    %v406 = vpop.xlane.xlu0 %405
    %v407 = vsel %vm177, %v336, -inf
    %408 = vmax.xlane.f32.xlu0 %v407
    %v409 = vpop.xlane.xlu0 %408
    %v410 = vsel %vm177, %v363, -inf
    %411 = vmax.xlane.f32.xlu0 %v410
    %v412 = vpop.xlane.xlu0 %411
    %v413 = vsel %vm177, %v390, -inf
    %414 = vmax.xlane.f32.xlu0 %v413
    %v415 = vpop.xlane.xlu0 %414
    %v416 = vsub.f32 %v201, %v394
    %v417 = vsub.f32 %v228, %v397
    %v418 = vsub.f32 %v255, %v400
    %v419 = vsub.f32 %v282, %v403
    %v420 = vsub.f32 %v309, %v406
    %v421 = vsub.f32 %v336, %v409
    %v422 = vsub.f32 %v363, %v412
    %v423 = vsub.f32 %v390, %v415
    %v424 = vmul.f32 %v416, 1.442695
    %v425 = vpow.pop %v424
    %v426 = vmul.f32 %v417, 1.442695
    %v427 = vpow.pop %v426
    %v428 = vmul.f32 %v418, 1.442695
    %v429 = vpow.pop %v428
    %v430 = vmul.f32 %v419, 1.442695
    %v431 = vpow.pop %v430
    %v432 = vmul.f32 %v420, 1.442695
    %v433 = vpow.pop %v432
    %v434 = vmul.f32 %v421, 1.442695
    %v435 = vpow.pop %v434
    %v436 = vmul.f32 %v422, 1.442695
    %v437 = vpow.pop %v436
    %v438 = vmul.f32 %v423, 1.442695
    %v439 = vpow.pop %v438
    %v440 = vsel %vm177, %v425, 0.0
    %441 = vadd.xlane.f32.xlu0 %v440
    %v442 = vpop.xlane.xlu0 %441
    %v443 = vsel %vm177, %v427, 0.0
    %444 = vadd.xlane.f32.xlu0 %v443
    %v445 = vpop.xlane.xlu0 %444
    %v446 = vsel %vm177, %v429, 0.0
    %447 = vadd.xlane.f32.xlu0 %v446
    %v448 = vpop.xlane.xlu0 %447
    %v449 = vsel %vm177, %v431, 0.0
    %450 = vadd.xlane.f32.xlu0 %v449
    %v451 = vpop.xlane.xlu0 %450
    %v452 = vsel %vm177, %v433, 0.0
    %453 = vadd.xlane.f32.xlu0 %v452
    %v454 = vpop.xlane.xlu0 %453
    %v455 = vsel %vm177, %v435, 0.0
    %456 = vadd.xlane.f32.xlu0 %v455
    %v457 = vpop.xlane.xlu0 %456
    %v458 = vsel %vm177, %v437, 0.0
    %459 = vadd.xlane.f32.xlu0 %v458
    %v460 = vpop.xlane.xlu0 %459
    %v461 = vsel %vm177, %v439, 0.0
    %462 = vadd.xlane.f32.xlu0 %v461
    %v463 = vpop.xlane.xlu0 %462
    %v464 = vrcp.pop %v442
    %v465 = vrcp.pop %v445
    %v466 = vrcp.pop %v448
    %v467 = vrcp.pop %v451
    %v468 = vrcp.pop %v454
    %v469 = vrcp.pop %v457
    %v470 = vrcp.pop %v460
    %v471 = vrcp.pop %v463
    %v472 = vmul.f32 %v425, %v464
    %v473 = vmul.f32 %v427, %v465
    %v474 = vmul.f32 %v429, %v466
    %v475 = vmul.f32 %v431, %v467
    %v476 = vmul.f32 %v433, %v468
    %v477 = vmul.f32 %v435, %v469
    %v478 = vmul.f32 %v437, %v470
    %v479 = vmul.f32 %v439, %v471
    %480 = vrot.lane.b32.xlu0 %v143, 64
    %v481 = vpop.permute.xlu0 %480
    %v484 = vsel %vm177, %v472, 0
    %486 = vmatpush.msra.mxu0 0.0
    %487 = vmatpush.msra.mxu0 0.0
    %488 = vmatpush.msra.mxu0 0.0
    %489 = vmatpush.msra.mxu0 0.0
    %490 = vmatpush.msra.mxu0 0.0
    %491 = vmatpush.msra.mxu0 0.0
    %492 = vmatpush.msra.mxu0 0.0
    %493 = vmatpush.msra.mxu0 0.0
    %494 = vmatpush.msra.mxu0 0.0
    %495 = vmatpush.msra.mxu0 0.0
    %496 = vmatpush.msra.mxu0 0.0
    %497 = vmatpush.msra.mxu0 0.0
    %498 = vmatpush.msra.mxu0 0.0
    %499 = vmatpush.msra.mxu0 0.0
    %500 = vmatpush.msra.mxu0 0.0
    %501 = vmatpush.msra.mxu0 %v481
    %502 = vmatmul.f32.gmra.mxu0 %v484
    %v503 = vpop.f32.mrf.mxu0
    %v504 = vadd.f32 0.0, %v503
    %505 = vdwg.mxu0
    %506 = vrot.lane.b32.xlu0 %v149, 64
    %v507 = vpop.permute.xlu0 %506
    %v510 = vsel %vm177, %v473, 0
    %512 = vmatpush.msra.mxu0 0.0
    %513 = vmatpush.msra.mxu0 0.0
    %514 = vmatpush.msra.mxu0 0.0
    %515 = vmatpush.msra.mxu0 0.0
    %516 = vmatpush.msra.mxu0 0.0
    %517 = vmatpush.msra.mxu0 0.0
    %518 = vmatpush.msra.mxu0 0.0
    %519 = vmatpush.msra.mxu0 0.0
    %520 = vmatpush.msra.mxu0 0.0
    %521 = vmatpush.msra.mxu0 0.0
    %522 = vmatpush.msra.mxu0 0.0
    %523 = vmatpush.msra.mxu0 0.0
    %524 = vmatpush.msra.mxu0 0.0
    %525 = vmatpush.msra.mxu0 0.0
    %526 = vmatpush.msra.mxu0 0.0
    %527 = vmatpush.msra.mxu0 %v507
    %528 = vmatmul.f32.gmra.mxu0 %v510
    %v529 = vpop.f32.mrf.mxu0
    %v530 = vadd.f32 0.0, %v529
    %531 = vdwg.mxu0
    %532 = vrot.lane.b32.xlu0 %v152, 64
    %v533 = vpop.permute.xlu0 %532
    %v536 = vsel %vm177, %v474, 0
    %538 = vmatpush.msra.mxu0 0.0
    %539 = vmatpush.msra.mxu0 0.0
    %540 = vmatpush.msra.mxu0 0.0
    %541 = vmatpush.msra.mxu0 0.0
    %542 = vmatpush.msra.mxu0 0.0
    %543 = vmatpush.msra.mxu0 0.0
    %544 = vmatpush.msra.mxu0 0.0
    %545 = vmatpush.msra.mxu0 0.0
    %546 = vmatpush.msra.mxu0 0.0
    %547 = vmatpush.msra.mxu0 0.0
    %548 = vmatpush.msra.mxu0 0.0
    %549 = vmatpush.msra.mxu0 0.0
    %550 = vmatpush.msra.mxu0 0.0
    %551 = vmatpush.msra.mxu0 0.0
    %552 = vmatpush.msra.mxu0 0.0
    %553 = vmatpush.msra.mxu0 %v533
    %554 = vmatmul.f32.gmra.mxu0 %v536
    %v555 = vpop.f32.mrf.mxu0
    %v556 = vadd.f32 0.0, %v555
    %557 = vdwg.mxu0
    %558 = vrot.lane.b32.xlu0 %v155, 64
    %v559 = vpop.permute.xlu0 %558
    %v562 = vsel %vm177, %v475, 0
    %564 = vmatpush.msra.mxu0 0.0
    %565 = vmatpush.msra.mxu0 0.0
    %566 = vmatpush.msra.mxu0 0.0
    %567 = vmatpush.msra.mxu0 0.0
    %568 = vmatpush.msra.mxu0 0.0
    %569 = vmatpush.msra.mxu0 0.0
    %570 = vmatpush.msra.mxu0 0.0
    %571 = vmatpush.msra.mxu0 0.0
    %572 = vmatpush.msra.mxu0 0.0
    %573 = vmatpush.msra.mxu0 0.0
    %574 = vmatpush.msra.mxu0 0.0
    %575 = vmatpush.msra.mxu0 0.0
    %576 = vmatpush.msra.mxu0 0.0
    %577 = vmatpush.msra.mxu0 0.0
    %578 = vmatpush.msra.mxu0 0.0
    %579 = vmatpush.msra.mxu0 %v559
    %580 = vmatmul.f32.gmra.mxu0 %v562
    %v581 = vpop.f32.mrf.mxu0
    %v582 = vadd.f32 0.0, %v581
    %583 = vdwg.mxu0
    %584 = vrot.lane.b32.xlu0 %v145, 64
    %v585 = vpop.permute.xlu0 %584
    %v588 = vsel %vm177, %v476, 0
    %590 = vmatpush.msra.mxu0 0.0
    %591 = vmatpush.msra.mxu0 0.0
    %592 = vmatpush.msra.mxu0 0.0
    %593 = vmatpush.msra.mxu0 0.0
    %594 = vmatpush.msra.mxu0 0.0
    %595 = vmatpush.msra.mxu0 0.0
    %596 = vmatpush.msra.mxu0 0.0
    %597 = vmatpush.msra.mxu0 0.0
    %598 = vmatpush.msra.mxu0 0.0
    %599 = vmatpush.msra.mxu0 0.0
    %600 = vmatpush.msra.mxu0 0.0
    %601 = vmatpush.msra.mxu0 0.0
    %602 = vmatpush.msra.mxu0 0.0
    %603 = vmatpush.msra.mxu0 0.0
    %604 = vmatpush.msra.mxu0 0.0
    %605 = vmatpush.msra.mxu0 %v585
    %606 = vmatmul.f32.gmra.mxu0 %v588
    %v607 = vpop.f32.mrf.mxu0
    %v608 = vadd.f32 0.0, %v607
    %609 = vdwg.mxu0
    %610 = vrot.lane.b32.xlu0 %v159, 64
    %v611 = vpop.permute.xlu0 %610
    %v614 = vsel %vm177, %v477, 0
    %616 = vmatpush.msra.mxu0 0.0
    %617 = vmatpush.msra.mxu0 0.0
    %618 = vmatpush.msra.mxu0 0.0
    %619 = vmatpush.msra.mxu0 0.0
    %620 = vmatpush.msra.mxu0 0.0
    %621 = vmatpush.msra.mxu0 0.0
    %622 = vmatpush.msra.mxu0 0.0
    %623 = vmatpush.msra.mxu0 0.0
    %624 = vmatpush.msra.mxu0 0.0
    %625 = vmatpush.msra.mxu0 0.0
    %626 = vmatpush.msra.mxu0 0.0
    %627 = vmatpush.msra.mxu0 0.0
    %628 = vmatpush.msra.mxu0 0.0
    %629 = vmatpush.msra.mxu0 0.0
    %630 = vmatpush.msra.mxu0 0.0
    %631 = vmatpush.msra.mxu0 %v611
    %632 = vmatmul.f32.gmra.mxu0 %v614
    %v633 = vpop.f32.mrf.mxu0
    %v634 = vadd.f32 0.0, %v633
    %635 = vdwg.mxu0
    %636 = vrot.lane.b32.xlu0 %v162, 64
    %v637 = vpop.permute.xlu0 %636
    %v640 = vsel %vm177, %v478, 0
    %642 = vmatpush.msra.mxu0 0.0
    %643 = vmatpush.msra.mxu0 0.0
    %644 = vmatpush.msra.mxu0 0.0
    %645 = vmatpush.msra.mxu0 0.0
    %646 = vmatpush.msra.mxu0 0.0
    %647 = vmatpush.msra.mxu0 0.0
    %648 = vmatpush.msra.mxu0 0.0
    %649 = vmatpush.msra.mxu0 0.0
    %650 = vmatpush.msra.mxu0 0.0
    %651 = vmatpush.msra.mxu0 0.0
    %652 = vmatpush.msra.mxu0 0.0
    %653 = vmatpush.msra.mxu0 0.0
    %654 = vmatpush.msra.mxu0 0.0
    %655 = vmatpush.msra.mxu0 0.0
    %656 = vmatpush.msra.mxu0 0.0
    %657 = vmatpush.msra.mxu0 %v637
    %658 = vmatmul.f32.gmra.mxu0 %v640
    %v659 = vpop.f32.mrf.mxu0
    %v660 = vadd.f32 0.0, %v659
    %661 = vdwg.mxu0
    %662 = vrot.lane.b32.xlu0 %v165, 64
    %v663 = vpop.permute.xlu0 %662
    %v666 = vsel %vm177, %v479, 0
    %668 = vmatpush.msra.mxu0 0.0
    %669 = vmatpush.msra.mxu0 0.0
    %670 = vmatpush.msra.mxu0 0.0
    %671 = vmatpush.msra.mxu0 0.0
    %672 = vmatpush.msra.mxu0 0.0
    %673 = vmatpush.msra.mxu0 0.0
    %674 = vmatpush.msra.mxu0 0.0
    %675 = vmatpush.msra.mxu0 0.0
    %676 = vmatpush.msra.mxu0 0.0
    %677 = vmatpush.msra.mxu0 0.0
    %678 = vmatpush.msra.mxu0 0.0
    %679 = vmatpush.msra.mxu0 0.0
    %680 = vmatpush.msra.mxu0 0.0
    %681 = vmatpush.msra.mxu0 0.0
    %682 = vmatpush.msra.mxu0 0.0
    %683 = vmatpush.msra.mxu0 %v663
    %684 = vmatmul.f32.gmra.mxu0 %v666
    %v685 = vpop.f32.mrf.mxu0
    %v686 = vadd.f32 0.0, %v685
    %687 = vdwg.mxu0
    %689 = vrot.lane.b32.xlu0 %v530, 8
    %v690 = vpop.permute.xlu0 %689
    %693 = vrot.lane.b32.xlu0 %v556, 16
    %v694 = vpop.permute.xlu0 %693
    %697 = vrot.lane.b32.xlu0 %v582, 24
    %v698 = vpop.permute.xlu0 %697
    %v700 = vsel %vm177, %v504, %v690
    %vm701 = vcmask 130048
    %v702 = vsel %vm701, %v700, %v694
    %vm703 = vcmask 195584
    %v704 = vsel %vm703, %v702, %v698
    %706 = vrot.lane.b32.xlu0 %v634, 8
    %v707 = vpop.permute.xlu0 %706
    %710 = vrot.lane.b32.xlu0 %v660, 16
    %v711 = vpop.permute.xlu0 %710
    %714 = vrot.lane.b32.xlu0 %v686, 24
    %v715 = vpop.permute.xlu0 %714
    %v717 = vsel %vm177, %v608, %v707
    %v718 = vsel %vm701, %v717, %v711
    %v719 = vsel %vm703, %v718, %v715
    %v720 = vperm.slane %v33, 1
    %v722 = vsel %vm45, %v704, 0
    %v725 = vsel %vm45, %v719, 0
    %727 = vmatpush.msra.mxu0 0.0
    %728 = vmatpush.msra.mxu0 0.0
    %729 = vmatpush.msra.mxu0 0.0
    %730 = vmatpush.msra.mxu0 0.0
    %731 = vmatpush.msra.mxu0 0.0
    %732 = vmatpush.msra.mxu0 0.0
    %733 = vmatpush.msra.mxu0 0.0
    %734 = vmatpush.msra.mxu0 0.0
    %735 = vmatpush.msra.mxu0 0.0
    %736 = vmatpush.msra.mxu0 0.0
    %737 = vmatpush.msra.mxu0 0.0
    %738 = vmatpush.msra.mxu0 0.0
    %739 = vmatpush.msra.mxu0 %v37
    %740 = vmatpush.msra.mxu0 %v36
    %741 = vmatpush.msra.mxu0 %v35
    %742 = vmatpush.msra.mxu0 %v34
    %743 = vmatmul.f32.gmra.mxu0 %v722
    %v744 = vpop.f32.mrf.mxu0
    %v745 = vadd.f32 %v720, %v744
    %746 = vmatmul.f32.gmra.mxu0 %v725
    %v747 = vpop.f32.mrf.mxu0
    %v748 = vadd.f32 %v720, %v747
    %749 = vdwg.mxu0
    %v750 = vadd.f32 %v98, %v745
    %v751 = vadd.f32 %v99, %v748
    %v752 = vsel %vm45, %v750, 0.0
    %753 = vadd.xlane.f32.xlu0 %v752
    %v754 = vpop.xlane.xlu0 %753
    %v755 = vsel %vm45, %v751, 0.0
    %756 = vadd.xlane.f32.xlu0 %v755
    %v757 = vpop.xlane.xlu0 %756
    %v758 = vmul.f32 %v750, %v750
    %v759 = vmul.f32 %v751, %v751
    %v760 = vsel %vm45, %v758, 0.0
    %761 = vadd.xlane.f32.xlu0 %v760
    %v762 = vpop.xlane.xlu0 %761
    %v763 = vsel %vm45, %v759, 0.0
    %764 = vadd.xlane.f32.xlu0 %v763
    %v765 = vpop.xlane.xlu0 %764
    %v766 = vmul.f32 %v754, 0.03125
    %v767 = vmul.f32 %v757, 0.03125
    %v768 = vmul.f32 %v762, 0.03125
    %v769 = vmul.f32 %v765, 0.03125
    %v770 = vmul.f32 %v766, %v766
    %v771 = vmul.f32 %v767, %v767
    %v772 = vsub.f32 %v768, %v770
    %v773 = vsub.f32 %v769, %v771
    %v774 = vadd.f32 %v772, 1e-12
    %v775 = vadd.f32 %v773, 1e-12
    %v776 = vrsqrt.pop %v774
    %v777 = vmul.f32 %v776, %v774
    %v778 = vmul.f32 %v777, %v776
    %v779 = vmul.f32 0.5, %v778
    %v780 = vsub.f32 1.5, %v779
    %v781 = vmul.f32 %v776, %v780
    %vm782 = vweird.f32 %v774
    %vm783 = vweird.f32 %v776
    %vm784 = vmor %vm782, %vm783
    %v785 = vsel %vm784, %v776, %v781
    %v786 = vrsqrt.pop %v775
    %v787 = vmul.f32 %v786, %v775
    %v788 = vmul.f32 %v787, %v786
    %v789 = vmul.f32 0.5, %v788
    %v790 = vsub.f32 1.5, %v789
    %v791 = vmul.f32 %v786, %v790
    %vm792 = vweird.f32 %v775
    %vm793 = vweird.f32 %v786
    %vm794 = vmor %vm792, %vm793
    %v795 = vsel %vm794, %v786, %v791
    %v796 = vsub.f32 %v750, %v766
    %v797 = vsub.f32 %v751, %v767
    %v798 = vmul.f32 %v796, %v785
    %v799 = vmul.f32 %v797, %v795
    %v800 = vperm.slane %v33, 2
    %v801 = vmul.f32 %v798, %v800
    %v802 = vmul.f32 %v799, %v800
    %v803 = vperm.slane %v33, 3
    %v804 = vadd.f32 %v801, %v803
    %v805 = vadd.f32 %v802, %v803
    %v806 = vpack.c.bf16 %v805, %v804
    %v807 = vperm.slane %v33, 4
    %v812 = vunpack.c.l.b16 %v104
    %v813 = vunpack.c.l.b16 %v105
    %v814 = vunpack.c.l.b16 %v106
    %v815 = vunpack.c.l.b16 %v107
    %v816 = vpack.c.b16 %v813, %v812
    %v817 = vpack.c.b16 %v815, %v814
    %v821 = vsel %vm45, %v806, 0
    %823 = vmatpush.bf16.msra.mxu0 0
    %824 = vmatpush.bf16.msra.mxu0 0
    %825 = vmatpush.bf16.msra.mxu0 0
    %826 = vmatpush.bf16.msra.mxu0 0
    %827 = vmatpush.bf16.msra.mxu0 0
    %828 = vmatpush.bf16.msra.mxu0 0
    %829 = vmatpush.bf16.msra.mxu0 %v817
    %830 = vmatpush.bf16.msra.mxu0 %v816
    %831 = vmatmul.bf16.gmra.mxu0 %v821
    %v832 = vpop.f32.mrf.mxu0
    %v833 = vadd.f32 %v807, %v832
    %v834 = vpop.f32.mrf.mxu0
    %v835 = vadd.f32 %v807, %v834
    %836 = vdwg.mxu0
    %v837 = vmul.f32 %v833, 0.5
    %v838 = vmul.f32 %v835, 0.5
    %v839 = vmul.f32 %v833, 0.044715
    %v840 = vmul.f32 %v835, 0.044715
    %v841 = vmul.f32 %v839, %v833
    %v842 = vmul.f32 %v840, %v835
    %v843 = vmul.f32 %v841, %v833
    %v844 = vmul.f32 %v842, %v835
    %v845 = vadd.f32 %v833, %v843
    %v846 = vadd.f32 %v835, %v844
    %v847 = vmul.f32 %v845, 0.7978846
    %v848 = vmul.f32 %v846, 0.7978846
    %v849 = vtanh.pop %v847
    %v850 = vtanh.pop %v848
    %v851 = vadd.f32 %v849, 1.0
    %v852 = vadd.f32 %v850, 1.0
    %v853 = vmul.f32 %v837, %v851
    %v854 = vmul.f32 %v838, %v852
    %v855 = vpack.c.bf16 %v854, %v853
    %v856 = vperm.slane %v33, 5
    %v865 = vunpack.c.l.b16 %v108
    %v866 = vunpack.c.l.b16 %v109
    %v867 = vunpack.c.l.b16 %v110
    %v868 = vunpack.c.l.b16 %v111
    %v869 = vunpack.c.l.b16 %v112
    %v870 = vunpack.c.l.b16 %v113
    %v871 = vunpack.c.l.b16 %v114
    %v872 = vunpack.c.l.b16 %v115
    %v873 = vpack.c.b16 %v866, %v865
    %v874 = vpack.c.b16 %v868, %v867
    %v875 = vpack.c.b16 %v870, %v869
    %v876 = vpack.c.b16 %v872, %v871
    %vm881 = vcmask 523264
    %v883 = vsel %vm881, %v855, 0
    %885 = vmatpush.bf16.msra.mxu0 0
    %886 = vmatpush.bf16.msra.mxu0 0
    %887 = vmatpush.bf16.msra.mxu0 0
    %888 = vmatpush.bf16.msra.mxu0 0
    %889 = vmatpush.bf16.msra.mxu0 %v876
    %890 = vmatpush.bf16.msra.mxu0 %v875
    %891 = vmatpush.bf16.msra.mxu0 %v874
    %892 = vmatpush.bf16.msra.mxu0 %v873
    %893 = vmatmul.bf16.gmra.mxu0 %v883
    %v894 = vpop.f32.mrf.mxu0
    %v895 = vadd.f32 %v856, %v894
    %v896 = vpop.f32.mrf.mxu0
    %v897 = vadd.f32 %v856, %v896
    %898 = vdwg.mxu0
    %v899 = vadd.f32 %v804, %v895
    %v900 = vadd.f32 %v805, %v897
    %v901 = vsel %vm45, %v899, 0.0
    %902 = vadd.xlane.f32.xlu0 %v901
    %v903 = vpop.xlane.xlu0 %902
    %v904 = vsel %vm45, %v900, 0.0
    %905 = vadd.xlane.f32.xlu0 %v904
    %v906 = vpop.xlane.xlu0 %905
    %v907 = vmul.f32 %v899, %v899
    %v908 = vmul.f32 %v900, %v900
    %v909 = vsel %vm45, %v907, 0.0
    %910 = vadd.xlane.f32.xlu0 %v909
    %v911 = vpop.xlane.xlu0 %910
    %v912 = vsel %vm45, %v908, 0.0
    %913 = vadd.xlane.f32.xlu0 %v912
    %v914 = vpop.xlane.xlu0 %913
    %v915 = vmul.f32 %v903, 0.03125
    %v916 = vmul.f32 %v906, 0.03125
    %v917 = vmul.f32 %v911, 0.03125
    %v918 = vmul.f32 %v914, 0.03125
    %v919 = vmul.f32 %v915, %v915
    %v920 = vmul.f32 %v916, %v916
    %v921 = vsub.f32 %v917, %v919
    %v922 = vsub.f32 %v918, %v920
    %v923 = vadd.f32 %v921, 1e-12
    %v924 = vadd.f32 %v922, 1e-12
    %v925 = vrsqrt.pop %v923
    %v926 = vmul.f32 %v925, %v923
    %v927 = vmul.f32 %v926, %v925
    %v928 = vmul.f32 0.5, %v927
    %v929 = vsub.f32 1.5, %v928
    %v930 = vmul.f32 %v925, %v929
    %vm931 = vweird.f32 %v923
    %vm932 = vweird.f32 %v925
    %vm933 = vmor %vm931, %vm932
    %v934 = vsel %vm933, %v925, %v930
    %v935 = vrsqrt.pop %v924
    %v936 = vmul.f32 %v935, %v924
    %v937 = vmul.f32 %v936, %v935
    %v938 = vmul.f32 0.5, %v937
    %v939 = vsub.f32 1.5, %v938
    %v940 = vmul.f32 %v935, %v939
    %vm941 = vweird.f32 %v924
    %vm942 = vweird.f32 %v935
    %vm943 = vmor %vm941, %vm942
    %v944 = vsel %vm943, %v935, %v940
    %v945 = vsub.f32 %v899, %v915
    %v946 = vsub.f32 %v900, %v916
    %v947 = vmul.f32 %v945, %v934
    %v948 = vmul.f32 %v946, %v944
    %v949 = vperm.slane %v33, 6
    %v950 = vmul.f32 %v947, %v949
    %v951 = vmul.f32 %v948, %v949
    %v952 = vperm.slane %v33, 7
    %v953 = vadd.f32 %v950, %v952
    %v954 = vadd.f32 %v951, %v952
    %v955 = vld [vmem:[%s1 + $0x40] sm:$0xf]
    %v956 = vld [vmem:[%s1 + $0x44] sm:$0xf]
    %v957 = vld [vmem:[%s1 + $0x48] sm:$0xf]
    %v958 = vld [vmem:[%s1 + $0x4c] sm:$0xf]
    %v959 = vld [vmem:[%s1 + $0x50] sm:$0xf]
    %v960 = vld [vmem:[%s1 + $0x54] sm:$0xf]
    %v961 = vld [vmem:[%s1 + $0x58] sm:$0xf]
    %v962 = vld [vmem:[%s1 + $0x5c] sm:$0xf]
    %v963 = vld [vmem:[%s1 + $0x60] sm:$0xf]
    %v964 = vld [vmem:[%s1 + $0x64] sm:$0xf]
    %v965 = vld [vmem:[%s1 + $0x68] sm:$0xf]
    %v966 = vld [vmem:[%s1 + $0x6c] sm:$0xf]
    %v967 = vld [vmem:[%s1 + $0x70] sm:$0xf]
    %v968 = vld [vmem:[%s1 + $0x74] sm:$0xf]
    %v969 = vld [vmem:[%s1 + $0x78] sm:$0xf]
    %v970 = vld [vmem:[%s1 + $0x7c] sm:$0xf]
    %v971 = vpack.c.bf16 %v954, %v953
    %v972 = vperm.slane %v38, 0
    %v977 = vunpack.c.l.b16 %v955
    %v978 = vunpack.c.l.b16 %v956
    %v979 = vunpack.c.l.b16 %v957
    %v980 = vunpack.c.l.b16 %v958
    %v981 = vpack.c.b16 %v978, %v977
    %v982 = vpack.c.b16 %v980, %v979
    %v986 = vsel %vm45, %v971, 0
    %988 = vmatpush.bf16.msra.mxu0 0
    %989 = vmatpush.bf16.msra.mxu0 0
    %990 = vmatpush.bf16.msra.mxu0 0
    %991 = vmatpush.bf16.msra.mxu0 0
    %992 = vmatpush.bf16.msra.mxu0 0
    %993 = vmatpush.bf16.msra.mxu0 0
    %994 = vmatpush.bf16.msra.mxu0 %v982
    %995 = vmatpush.bf16.msra.mxu0 %v981
    %996 = vmatmul.bf16.gmra.mxu0 %v986
    %v997 = vpop.f32.mrf.mxu0
    %v998 = vadd.f32 %v972, %v997
    %v999 = vpop.f32.mrf.mxu0
    %v1000 = vadd.f32 %v972, %v999
    %1001 = vdwg.mxu0
    %1003 = vrot.lane.b32.xlu0 %v998, 120
    %v1004 = vpop.permute.xlu0 %1003
    %1006 = vrot.lane.b32.xlu0 %v998, 112
    %v1007 = vpop.permute.xlu0 %1006
    %1009 = vrot.lane.b32.xlu0 %v998, 104
    %v1010 = vpop.permute.xlu0 %1009
    %1013 = vrot.lane.b32.xlu0 %v1000, 120
    %v1014 = vpop.permute.xlu0 %1013
    %1016 = vrot.lane.b32.xlu0 %v1000, 112
    %v1017 = vpop.permute.xlu0 %1016
    %1019 = vrot.lane.b32.xlu0 %v1000, 104
    %v1020 = vpop.permute.xlu0 %1019
    %v1022 = vmul.f32 %v998, 0.35355338
    %v1023 = vmul.f32 %v1004, 0.35355338
    %v1024 = vmul.f32 %v1007, 0.35355338
    %v1025 = vmul.f32 %v1010, 0.35355338
    %v1026 = vmul.f32 %v1000, 0.35355338
    %v1027 = vmul.f32 %v1014, 0.35355338
    %v1028 = vmul.f32 %v1017, 0.35355338
    %v1029 = vmul.f32 %v1020, 0.35355338
    %1030 = vrot.lane.b32.xlu0 %v998, 96
    %v1031 = vpop.permute.xlu0 %1030
    %v1033 = vsel %vm177, %v1022, 0
    %v1035 = vsel %vm177, %v1031, 0
    %1037 = vmatpush.xpose.msra.mxu0 0.0
    %1038 = vmatpush.xpose.msra.mxu0 0.0
    %1039 = vmatpush.xpose.msra.mxu0 0.0
    %1040 = vmatpush.xpose.msra.mxu0 0.0
    %1041 = vmatpush.xpose.msra.mxu0 0.0
    %1042 = vmatpush.xpose.msra.mxu0 0.0
    %1043 = vmatpush.xpose.msra.mxu0 0.0
    %1044 = vmatpush.xpose.msra.mxu0 0.0
    %1045 = vmatpush.xpose.msra.mxu0 0.0
    %1046 = vmatpush.xpose.msra.mxu0 0.0
    %1047 = vmatpush.xpose.msra.mxu0 0.0
    %1048 = vmatpush.xpose.msra.mxu0 0.0
    %1049 = vmatpush.xpose.msra.mxu0 0.0
    %1050 = vmatpush.xpose.msra.mxu0 0.0
    %1051 = vmatpush.xpose.msra.mxu0 0.0
    %1052 = vmatpush.xpose.msra.mxu0 %v1035
    %1053 = vmatmul.f32.gmra.mxu0 %v1033
    %v1054 = vpop.f32.mrf.mxu0
    %v1055 = vadd.f32 0.0, %v1054
    %1056 = vdwg.mxu0
    %1057 = vrot.lane.b32.xlu0 %v1004, 96
    %v1058 = vpop.permute.xlu0 %1057
    %v1060 = vsel %vm177, %v1023, 0
    %v1062 = vsel %vm177, %v1058, 0
    %1064 = vmatpush.xpose.msra.mxu0 0.0
    %1065 = vmatpush.xpose.msra.mxu0 0.0
    %1066 = vmatpush.xpose.msra.mxu0 0.0
    %1067 = vmatpush.xpose.msra.mxu0 0.0
    %1068 = vmatpush.xpose.msra.mxu0 0.0
    %1069 = vmatpush.xpose.msra.mxu0 0.0
    %1070 = vmatpush.xpose.msra.mxu0 0.0
    %1071 = vmatpush.xpose.msra.mxu0 0.0
    %1072 = vmatpush.xpose.msra.mxu0 0.0
    %1073 = vmatpush.xpose.msra.mxu0 0.0
    %1074 = vmatpush.xpose.msra.mxu0 0.0
    %1075 = vmatpush.xpose.msra.mxu0 0.0
    %1076 = vmatpush.xpose.msra.mxu0 0.0
    %1077 = vmatpush.xpose.msra.mxu0 0.0
    %1078 = vmatpush.xpose.msra.mxu0 0.0
    %1079 = vmatpush.xpose.msra.mxu0 %v1062
    %1080 = vmatmul.f32.gmra.mxu0 %v1060
    %v1081 = vpop.f32.mrf.mxu0
    %v1082 = vadd.f32 0.0, %v1081
    %1083 = vdwg.mxu0
    %1084 = vrot.lane.b32.xlu0 %v1007, 96
    %v1085 = vpop.permute.xlu0 %1084
    %v1087 = vsel %vm177, %v1024, 0
    %v1089 = vsel %vm177, %v1085, 0
    %1091 = vmatpush.xpose.msra.mxu0 0.0
    %1092 = vmatpush.xpose.msra.mxu0 0.0
    %1093 = vmatpush.xpose.msra.mxu0 0.0
    %1094 = vmatpush.xpose.msra.mxu0 0.0
    %1095 = vmatpush.xpose.msra.mxu0 0.0
    %1096 = vmatpush.xpose.msra.mxu0 0.0
    %1097 = vmatpush.xpose.msra.mxu0 0.0
    %1098 = vmatpush.xpose.msra.mxu0 0.0
    %1099 = vmatpush.xpose.msra.mxu0 0.0
    %1100 = vmatpush.xpose.msra.mxu0 0.0
    %1101 = vmatpush.xpose.msra.mxu0 0.0
    %1102 = vmatpush.xpose.msra.mxu0 0.0
    %1103 = vmatpush.xpose.msra.mxu0 0.0
    %1104 = vmatpush.xpose.msra.mxu0 0.0
    %1105 = vmatpush.xpose.msra.mxu0 0.0
    %1106 = vmatpush.xpose.msra.mxu0 %v1089
    %1107 = vmatmul.f32.gmra.mxu0 %v1087
    %v1108 = vpop.f32.mrf.mxu0
    %v1109 = vadd.f32 0.0, %v1108
    %1110 = vdwg.mxu0
    %1111 = vrot.lane.b32.xlu0 %v1010, 96
    %v1112 = vpop.permute.xlu0 %1111
    %v1114 = vsel %vm177, %v1025, 0
    %v1116 = vsel %vm177, %v1112, 0
    %1118 = vmatpush.xpose.msra.mxu0 0.0
    %1119 = vmatpush.xpose.msra.mxu0 0.0
    %1120 = vmatpush.xpose.msra.mxu0 0.0
    %1121 = vmatpush.xpose.msra.mxu0 0.0
    %1122 = vmatpush.xpose.msra.mxu0 0.0
    %1123 = vmatpush.xpose.msra.mxu0 0.0
    %1124 = vmatpush.xpose.msra.mxu0 0.0
    %1125 = vmatpush.xpose.msra.mxu0 0.0
    %1126 = vmatpush.xpose.msra.mxu0 0.0
    %1127 = vmatpush.xpose.msra.mxu0 0.0
    %1128 = vmatpush.xpose.msra.mxu0 0.0
    %1129 = vmatpush.xpose.msra.mxu0 0.0
    %1130 = vmatpush.xpose.msra.mxu0 0.0
    %1131 = vmatpush.xpose.msra.mxu0 0.0
    %1132 = vmatpush.xpose.msra.mxu0 0.0
    %1133 = vmatpush.xpose.msra.mxu0 %v1116
    %1134 = vmatmul.f32.gmra.mxu0 %v1114
    %v1135 = vpop.f32.mrf.mxu0
    %v1136 = vadd.f32 0.0, %v1135
    %1137 = vdwg.mxu0
    %1138 = vrot.lane.b32.xlu0 %v1000, 96
    %v1139 = vpop.permute.xlu0 %1138
    %v1141 = vsel %vm177, %v1026, 0
    %v1143 = vsel %vm177, %v1139, 0
    %1145 = vmatpush.xpose.msra.mxu0 0.0
    %1146 = vmatpush.xpose.msra.mxu0 0.0
    %1147 = vmatpush.xpose.msra.mxu0 0.0
    %1148 = vmatpush.xpose.msra.mxu0 0.0
    %1149 = vmatpush.xpose.msra.mxu0 0.0
    %1150 = vmatpush.xpose.msra.mxu0 0.0
    %1151 = vmatpush.xpose.msra.mxu0 0.0
    %1152 = vmatpush.xpose.msra.mxu0 0.0
    %1153 = vmatpush.xpose.msra.mxu0 0.0
    %1154 = vmatpush.xpose.msra.mxu0 0.0
    %1155 = vmatpush.xpose.msra.mxu0 0.0
    %1156 = vmatpush.xpose.msra.mxu0 0.0
    %1157 = vmatpush.xpose.msra.mxu0 0.0
    %1158 = vmatpush.xpose.msra.mxu0 0.0
    %1159 = vmatpush.xpose.msra.mxu0 0.0
    %1160 = vmatpush.xpose.msra.mxu0 %v1143
    %1161 = vmatmul.f32.gmra.mxu0 %v1141
    %v1162 = vpop.f32.mrf.mxu0
    %v1163 = vadd.f32 0.0, %v1162
    %1164 = vdwg.mxu0
    %1165 = vrot.lane.b32.xlu0 %v1014, 96
    %v1166 = vpop.permute.xlu0 %1165
    %v1168 = vsel %vm177, %v1027, 0
    %v1170 = vsel %vm177, %v1166, 0
    %1172 = vmatpush.xpose.msra.mxu0 0.0
    %1173 = vmatpush.xpose.msra.mxu0 0.0
    %1174 = vmatpush.xpose.msra.mxu0 0.0
    %1175 = vmatpush.xpose.msra.mxu0 0.0
    %1176 = vmatpush.xpose.msra.mxu0 0.0
    %1177 = vmatpush.xpose.msra.mxu0 0.0
    %1178 = vmatpush.xpose.msra.mxu0 0.0
    %1179 = vmatpush.xpose.msra.mxu0 0.0
    %1180 = vmatpush.xpose.msra.mxu0 0.0
    %1181 = vmatpush.xpose.msra.mxu0 0.0
    %1182 = vmatpush.xpose.msra.mxu0 0.0
    %1183 = vmatpush.xpose.msra.mxu0 0.0
    %1184 = vmatpush.xpose.msra.mxu0 0.0
    %1185 = vmatpush.xpose.msra.mxu0 0.0
    %1186 = vmatpush.xpose.msra.mxu0 0.0
    %1187 = vmatpush.xpose.msra.mxu0 %v1170
    %1188 = vmatmul.f32.gmra.mxu0 %v1168
    %v1189 = vpop.f32.mrf.mxu0
    %v1190 = vadd.f32 0.0, %v1189
    %1191 = vdwg.mxu0
    %1192 = vrot.lane.b32.xlu0 %v1017, 96
    %v1193 = vpop.permute.xlu0 %1192
    %v1195 = vsel %vm177, %v1028, 0
    %v1197 = vsel %vm177, %v1193, 0
    %1199 = vmatpush.xpose.msra.mxu0 0.0
    %1200 = vmatpush.xpose.msra.mxu0 0.0
    %1201 = vmatpush.xpose.msra.mxu0 0.0
    %1202 = vmatpush.xpose.msra.mxu0 0.0
    %1203 = vmatpush.xpose.msra.mxu0 0.0
    %1204 = vmatpush.xpose.msra.mxu0 0.0
    %1205 = vmatpush.xpose.msra.mxu0 0.0
    %1206 = vmatpush.xpose.msra.mxu0 0.0
    %1207 = vmatpush.xpose.msra.mxu0 0.0
    %1208 = vmatpush.xpose.msra.mxu0 0.0
    %1209 = vmatpush.xpose.msra.mxu0 0.0
    %1210 = vmatpush.xpose.msra.mxu0 0.0
    %1211 = vmatpush.xpose.msra.mxu0 0.0
    %1212 = vmatpush.xpose.msra.mxu0 0.0
    %1213 = vmatpush.xpose.msra.mxu0 0.0
    %1214 = vmatpush.xpose.msra.mxu0 %v1197
    %1215 = vmatmul.f32.gmra.mxu0 %v1195
    %v1216 = vpop.f32.mrf.mxu0
    %v1217 = vadd.f32 0.0, %v1216
    %1218 = vdwg.mxu0
    %1219 = vrot.lane.b32.xlu0 %v1020, 96
    %v1220 = vpop.permute.xlu0 %1219
    %v1222 = vsel %vm177, %v1029, 0
    %v1224 = vsel %vm177, %v1220, 0
    %1226 = vmatpush.xpose.msra.mxu0 0.0
    %1227 = vmatpush.xpose.msra.mxu0 0.0
    %1228 = vmatpush.xpose.msra.mxu0 0.0
    %1229 = vmatpush.xpose.msra.mxu0 0.0
    %1230 = vmatpush.xpose.msra.mxu0 0.0
    %1231 = vmatpush.xpose.msra.mxu0 0.0
    %1232 = vmatpush.xpose.msra.mxu0 0.0
    %1233 = vmatpush.xpose.msra.mxu0 0.0
    %1234 = vmatpush.xpose.msra.mxu0 0.0
    %1235 = vmatpush.xpose.msra.mxu0 0.0
    %1236 = vmatpush.xpose.msra.mxu0 0.0
    %1237 = vmatpush.xpose.msra.mxu0 0.0
    %1238 = vmatpush.xpose.msra.mxu0 0.0
    %1239 = vmatpush.xpose.msra.mxu0 0.0
    %1240 = vmatpush.xpose.msra.mxu0 0.0
    %1241 = vmatpush.xpose.msra.mxu0 %v1224
    %1242 = vmatmul.f32.gmra.mxu0 %v1222
    %v1243 = vpop.f32.mrf.mxu0
    %v1244 = vadd.f32 0.0, %v1243
    %1245 = vdwg.mxu0
    %v1246 = vsel %vm177, %v1055, -inf
    %1247 = vmax.xlane.f32.xlu0 %v1246
    %v1248 = vpop.xlane.xlu0 %1247
    %v1249 = vsel %vm177, %v1082, -inf
    %1250 = vmax.xlane.f32.xlu0 %v1249
    %v1251 = vpop.xlane.xlu0 %1250
    %v1252 = vsel %vm177, %v1109, -inf
    %1253 = vmax.xlane.f32.xlu0 %v1252
    %v1254 = vpop.xlane.xlu0 %1253
    %v1255 = vsel %vm177, %v1136, -inf
    %1256 = vmax.xlane.f32.xlu0 %v1255
    %v1257 = vpop.xlane.xlu0 %1256
    %v1258 = vsel %vm177, %v1163, -inf
    %1259 = vmax.xlane.f32.xlu0 %v1258
    %v1260 = vpop.xlane.xlu0 %1259
    %v1261 = vsel %vm177, %v1190, -inf
    %1262 = vmax.xlane.f32.xlu0 %v1261
    %v1263 = vpop.xlane.xlu0 %1262
    %v1264 = vsel %vm177, %v1217, -inf
    %1265 = vmax.xlane.f32.xlu0 %v1264
    %v1266 = vpop.xlane.xlu0 %1265
    %v1267 = vsel %vm177, %v1244, -inf
    %1268 = vmax.xlane.f32.xlu0 %v1267
    %v1269 = vpop.xlane.xlu0 %1268
    %v1270 = vsub.f32 %v1055, %v1248
    %v1271 = vsub.f32 %v1082, %v1251
    %v1272 = vsub.f32 %v1109, %v1254
    %v1273 = vsub.f32 %v1136, %v1257
    %v1274 = vsub.f32 %v1163, %v1260
    %v1275 = vsub.f32 %v1190, %v1263
    %v1276 = vsub.f32 %v1217, %v1266
    %v1277 = vsub.f32 %v1244, %v1269
    %v1278 = vmul.f32 %v1270, 1.442695
    %v1279 = vpow.pop %v1278
    %v1280 = vmul.f32 %v1271, 1.442695
    %v1281 = vpow.pop %v1280
    %v1282 = vmul.f32 %v1272, 1.442695
    %v1283 = vpow.pop %v1282
    %v1284 = vmul.f32 %v1273, 1.442695
    %v1285 = vpow.pop %v1284
    %v1286 = vmul.f32 %v1274, 1.442695
    %v1287 = vpow.pop %v1286
    %v1288 = vmul.f32 %v1275, 1.442695
    %v1289 = vpow.pop %v1288
    %v1290 = vmul.f32 %v1276, 1.442695
    %v1291 = vpow.pop %v1290
    %v1292 = vmul.f32 %v1277, 1.442695
    %v1293 = vpow.pop %v1292
    %v1294 = vsel %vm177, %v1279, 0.0
    %1295 = vadd.xlane.f32.xlu0 %v1294
    %v1296 = vpop.xlane.xlu0 %1295
    %v1297 = vsel %vm177, %v1281, 0.0
    %1298 = vadd.xlane.f32.xlu0 %v1297
    %v1299 = vpop.xlane.xlu0 %1298
    %v1300 = vsel %vm177, %v1283, 0.0
    %1301 = vadd.xlane.f32.xlu0 %v1300
    %v1302 = vpop.xlane.xlu0 %1301
    %v1303 = vsel %vm177, %v1285, 0.0
    %1304 = vadd.xlane.f32.xlu0 %v1303
    %v1305 = vpop.xlane.xlu0 %1304
    %v1306 = vsel %vm177, %v1287, 0.0
    %1307 = vadd.xlane.f32.xlu0 %v1306
    %v1308 = vpop.xlane.xlu0 %1307
    %v1309 = vsel %vm177, %v1289, 0.0
    %1310 = vadd.xlane.f32.xlu0 %v1309
    %v1311 = vpop.xlane.xlu0 %1310
    %v1312 = vsel %vm177, %v1291, 0.0
    %1313 = vadd.xlane.f32.xlu0 %v1312
    %v1314 = vpop.xlane.xlu0 %1313
    %v1315 = vsel %vm177, %v1293, 0.0
    %1316 = vadd.xlane.f32.xlu0 %v1315
    %v1317 = vpop.xlane.xlu0 %1316
    %v1318 = vrcp.pop %v1296
    %v1319 = vrcp.pop %v1299
    %v1320 = vrcp.pop %v1302
    %v1321 = vrcp.pop %v1305
    %v1322 = vrcp.pop %v1308
    %v1323 = vrcp.pop %v1311
    %v1324 = vrcp.pop %v1314
    %v1325 = vrcp.pop %v1317
    %v1326 = vmul.f32 %v1279, %v1318
    %v1327 = vmul.f32 %v1281, %v1319
    %v1328 = vmul.f32 %v1283, %v1320
    %v1329 = vmul.f32 %v1285, %v1321
    %v1330 = vmul.f32 %v1287, %v1322
    %v1331 = vmul.f32 %v1289, %v1323
    %v1332 = vmul.f32 %v1291, %v1324
    %v1333 = vmul.f32 %v1293, %v1325
    %1334 = vrot.lane.b32.xlu0 %v998, 64
    %v1335 = vpop.permute.xlu0 %1334
    %v1338 = vsel %vm177, %v1326, 0
    %1340 = vmatpush.msra.mxu0 0.0
    %1341 = vmatpush.msra.mxu0 0.0
    %1342 = vmatpush.msra.mxu0 0.0
    %1343 = vmatpush.msra.mxu0 0.0
    %1344 = vmatpush.msra.mxu0 0.0
    %1345 = vmatpush.msra.mxu0 0.0
    %1346 = vmatpush.msra.mxu0 0.0
    %1347 = vmatpush.msra.mxu0 0.0
    %1348 = vmatpush.msra.mxu0 0.0
    %1349 = vmatpush.msra.mxu0 0.0
    %1350 = vmatpush.msra.mxu0 0.0
    %1351 = vmatpush.msra.mxu0 0.0
    %1352 = vmatpush.msra.mxu0 0.0
    %1353 = vmatpush.msra.mxu0 0.0
    %1354 = vmatpush.msra.mxu0 0.0
    %1355 = vmatpush.msra.mxu0 %v1335
    %1356 = vmatmul.f32.gmra.mxu0 %v1338
    %v1357 = vpop.f32.mrf.mxu0
    %v1358 = vadd.f32 0.0, %v1357
    %1359 = vdwg.mxu0
    %1360 = vrot.lane.b32.xlu0 %v1004, 64
    %v1361 = vpop.permute.xlu0 %1360
    %v1364 = vsel %vm177, %v1327, 0
    %1366 = vmatpush.msra.mxu0 0.0
    %1367 = vmatpush.msra.mxu0 0.0
    %1368 = vmatpush.msra.mxu0 0.0
    %1369 = vmatpush.msra.mxu0 0.0
    %1370 = vmatpush.msra.mxu0 0.0
    %1371 = vmatpush.msra.mxu0 0.0
    %1372 = vmatpush.msra.mxu0 0.0
    %1373 = vmatpush.msra.mxu0 0.0
    %1374 = vmatpush.msra.mxu0 0.0
    %1375 = vmatpush.msra.mxu0 0.0
    %1376 = vmatpush.msra.mxu0 0.0
    %1377 = vmatpush.msra.mxu0 0.0
    %1378 = vmatpush.msra.mxu0 0.0
    %1379 = vmatpush.msra.mxu0 0.0
    %1380 = vmatpush.msra.mxu0 0.0
    %1381 = vmatpush.msra.mxu0 %v1361
    %1382 = vmatmul.f32.gmra.mxu0 %v1364
    %v1383 = vpop.f32.mrf.mxu0
    %v1384 = vadd.f32 0.0, %v1383
    %1385 = vdwg.mxu0
    %1386 = vrot.lane.b32.xlu0 %v1007, 64
    %v1387 = vpop.permute.xlu0 %1386
    %v1390 = vsel %vm177, %v1328, 0
    %1392 = vmatpush.msra.mxu0 0.0
    %1393 = vmatpush.msra.mxu0 0.0
    %1394 = vmatpush.msra.mxu0 0.0
    %1395 = vmatpush.msra.mxu0 0.0
    %1396 = vmatpush.msra.mxu0 0.0
    %1397 = vmatpush.msra.mxu0 0.0
    %1398 = vmatpush.msra.mxu0 0.0
    %1399 = vmatpush.msra.mxu0 0.0
    %1400 = vmatpush.msra.mxu0 0.0
    %1401 = vmatpush.msra.mxu0 0.0
    %1402 = vmatpush.msra.mxu0 0.0
    %1403 = vmatpush.msra.mxu0 0.0
    %1404 = vmatpush.msra.mxu0 0.0
    %1405 = vmatpush.msra.mxu0 0.0
    %1406 = vmatpush.msra.mxu0 0.0
    %1407 = vmatpush.msra.mxu0 %v1387
    %1408 = vmatmul.f32.gmra.mxu0 %v1390
    %v1409 = vpop.f32.mrf.mxu0
    %v1410 = vadd.f32 0.0, %v1409
    %1411 = vdwg.mxu0
    %1412 = vrot.lane.b32.xlu0 %v1010, 64
    %v1413 = vpop.permute.xlu0 %1412
    %v1416 = vsel %vm177, %v1329, 0
    %1418 = vmatpush.msra.mxu0 0.0
    %1419 = vmatpush.msra.mxu0 0.0
    %1420 = vmatpush.msra.mxu0 0.0
    %1421 = vmatpush.msra.mxu0 0.0
    %1422 = vmatpush.msra.mxu0 0.0
    %1423 = vmatpush.msra.mxu0 0.0
    %1424 = vmatpush.msra.mxu0 0.0
    %1425 = vmatpush.msra.mxu0 0.0
    %1426 = vmatpush.msra.mxu0 0.0
    %1427 = vmatpush.msra.mxu0 0.0
    %1428 = vmatpush.msra.mxu0 0.0
    %1429 = vmatpush.msra.mxu0 0.0
    %1430 = vmatpush.msra.mxu0 0.0
    %1431 = vmatpush.msra.mxu0 0.0
    %1432 = vmatpush.msra.mxu0 0.0
    %1433 = vmatpush.msra.mxu0 %v1413
    %1434 = vmatmul.f32.gmra.mxu0 %v1416
    %v1435 = vpop.f32.mrf.mxu0
    %v1436 = vadd.f32 0.0, %v1435
    %1437 = vdwg.mxu0
    %1438 = vrot.lane.b32.xlu0 %v1000, 64
    %v1439 = vpop.permute.xlu0 %1438
    %v1442 = vsel %vm177, %v1330, 0
    %1444 = vmatpush.msra.mxu0 0.0
    %1445 = vmatpush.msra.mxu0 0.0
    %1446 = vmatpush.msra.mxu0 0.0
    %1447 = vmatpush.msra.mxu0 0.0
    %1448 = vmatpush.msra.mxu0 0.0
    %1449 = vmatpush.msra.mxu0 0.0
    %1450 = vmatpush.msra.mxu0 0.0
    %1451 = vmatpush.msra.mxu0 0.0
    %1452 = vmatpush.msra.mxu0 0.0
    %1453 = vmatpush.msra.mxu0 0.0
    %1454 = vmatpush.msra.mxu0 0.0
    %1455 = vmatpush.msra.mxu0 0.0
    %1456 = vmatpush.msra.mxu0 0.0
    %1457 = vmatpush.msra.mxu0 0.0
    %1458 = vmatpush.msra.mxu0 0.0
    %1459 = vmatpush.msra.mxu0 %v1439
    %1460 = vmatmul.f32.gmra.mxu0 %v1442
    %v1461 = vpop.f32.mrf.mxu0
    %v1462 = vadd.f32 0.0, %v1461
    %1463 = vdwg.mxu0
    %1464 = vrot.lane.b32.xlu0 %v1014, 64
    %v1465 = vpop.permute.xlu0 %1464
    %v1468 = vsel %vm177, %v1331, 0
    %1470 = vmatpush.msra.mxu0 0.0
    %1471 = vmatpush.msra.mxu0 0.0
    %1472 = vmatpush.msra.mxu0 0.0
    %1473 = vmatpush.msra.mxu0 0.0
    %1474 = vmatpush.msra.mxu0 0.0
    %1475 = vmatpush.msra.mxu0 0.0
    %1476 = vmatpush.msra.mxu0 0.0
    %1477 = vmatpush.msra.mxu0 0.0
    %1478 = vmatpush.msra.mxu0 0.0
    %1479 = vmatpush.msra.mxu0 0.0
    %1480 = vmatpush.msra.mxu0 0.0
    %1481 = vmatpush.msra.mxu0 0.0
    %1482 = vmatpush.msra.mxu0 0.0
    %1483 = vmatpush.msra.mxu0 0.0
    %1484 = vmatpush.msra.mxu0 0.0
    %1485 = vmatpush.msra.mxu0 %v1465
    %1486 = vmatmul.f32.gmra.mxu0 %v1468
    %v1487 = vpop.f32.mrf.mxu0
    %v1488 = vadd.f32 0.0, %v1487
    %1489 = vdwg.mxu0
    %1490 = vrot.lane.b32.xlu0 %v1017, 64
    %v1491 = vpop.permute.xlu0 %1490
    %v1494 = vsel %vm177, %v1332, 0
    %1496 = vmatpush.msra.mxu0 0.0
    %1497 = vmatpush.msra.mxu0 0.0
    %1498 = vmatpush.msra.mxu0 0.0
    %1499 = vmatpush.msra.mxu0 0.0
    %1500 = vmatpush.msra.mxu0 0.0
    %1501 = vmatpush.msra.mxu0 0.0
    %1502 = vmatpush.msra.mxu0 0.0
    %1503 = vmatpush.msra.mxu0 0.0
    %1504 = vmatpush.msra.mxu0 0.0
    %1505 = vmatpush.msra.mxu0 0.0
    %1506 = vmatpush.msra.mxu0 0.0
    %1507 = vmatpush.msra.mxu0 0.0
    %1508 = vmatpush.msra.mxu0 0.0
    %1509 = vmatpush.msra.mxu0 0.0
    %1510 = vmatpush.msra.mxu0 0.0
    %1511 = vmatpush.msra.mxu0 %v1491
    %1512 = vmatmul.f32.gmra.mxu0 %v1494
    %v1513 = vpop.f32.mrf.mxu0
    %v1514 = vadd.f32 0.0, %v1513
    %1515 = vdwg.mxu0
    %1516 = vrot.lane.b32.xlu0 %v1020, 64
    %v1517 = vpop.permute.xlu0 %1516
    %v1520 = vsel %vm177, %v1333, 0
    %1522 = vmatpush.msra.mxu0 0.0
    %1523 = vmatpush.msra.mxu0 0.0
    %1524 = vmatpush.msra.mxu0 0.0
    %1525 = vmatpush.msra.mxu0 0.0
    %1526 = vmatpush.msra.mxu0 0.0
    %1527 = vmatpush.msra.mxu0 0.0
    %1528 = vmatpush.msra.mxu0 0.0
    %1529 = vmatpush.msra.mxu0 0.0
    %1530 = vmatpush.msra.mxu0 0.0
    %1531 = vmatpush.msra.mxu0 0.0
    %1532 = vmatpush.msra.mxu0 0.0
    %1533 = vmatpush.msra.mxu0 0.0
    %1534 = vmatpush.msra.mxu0 0.0
    %1535 = vmatpush.msra.mxu0 0.0
    %1536 = vmatpush.msra.mxu0 0.0
    %1537 = vmatpush.msra.mxu0 %v1517
    %1538 = vmatmul.f32.gmra.mxu0 %v1520
    %v1539 = vpop.f32.mrf.mxu0
    %v1540 = vadd.f32 0.0, %v1539
    %1541 = vdwg.mxu0
    %1543 = vrot.lane.b32.xlu0 %v1384, 8
    %v1544 = vpop.permute.xlu0 %1543
    %1547 = vrot.lane.b32.xlu0 %v1410, 16
    %v1548 = vpop.permute.xlu0 %1547
    %1551 = vrot.lane.b32.xlu0 %v1436, 24
    %v1552 = vpop.permute.xlu0 %1551
    %v1554 = vsel %vm177, %v1358, %v1544
    %v1555 = vsel %vm701, %v1554, %v1548
    %v1556 = vsel %vm703, %v1555, %v1552
    %1558 = vrot.lane.b32.xlu0 %v1488, 8
    %v1559 = vpop.permute.xlu0 %1558
    %1562 = vrot.lane.b32.xlu0 %v1514, 16
    %v1563 = vpop.permute.xlu0 %1562
    %1566 = vrot.lane.b32.xlu0 %v1540, 24
    %v1567 = vpop.permute.xlu0 %1566
    %v1569 = vsel %vm177, %v1462, %v1559
    %v1570 = vsel %vm701, %v1569, %v1563
    %v1571 = vsel %vm703, %v1570, %v1567
    %v1572 = vperm.slane %v38, 1
    %v1574 = vsel %vm45, %v1556, 0
    %v1577 = vsel %vm45, %v1571, 0
    %1579 = vmatpush.msra.mxu0 0.0
    %1580 = vmatpush.msra.mxu0 0.0
    %1581 = vmatpush.msra.mxu0 0.0
    %1582 = vmatpush.msra.mxu0 0.0
    %1583 = vmatpush.msra.mxu0 0.0
    %1584 = vmatpush.msra.mxu0 0.0
    %1585 = vmatpush.msra.mxu0 0.0
    %1586 = vmatpush.msra.mxu0 0.0
    %1587 = vmatpush.msra.mxu0 0.0
    %1588 = vmatpush.msra.mxu0 0.0
    %1589 = vmatpush.msra.mxu0 0.0
    %1590 = vmatpush.msra.mxu0 0.0
    %1591 = vmatpush.msra.mxu0 %v42
    %1592 = vmatpush.msra.mxu0 %v41
    %1593 = vmatpush.msra.mxu0 %v40
    %1594 = vmatpush.msra.mxu0 %v39
    %1595 = vmatmul.f32.gmra.mxu0 %v1574
    %v1596 = vpop.f32.mrf.mxu0
    %v1597 = vadd.f32 %v1572, %v1596
    %1598 = vmatmul.f32.gmra.mxu0 %v1577
    %v1599 = vpop.f32.mrf.mxu0
    %v1600 = vadd.f32 %v1572, %v1599
    %1601 = vdwg.mxu0
    %v1602 = vadd.f32 %v953, %v1597
    %v1603 = vadd.f32 %v954, %v1600
    %v1604 = vsel %vm45, %v1602, 0.0
    %1605 = vadd.xlane.f32.xlu0 %v1604
    %v1606 = vpop.xlane.xlu0 %1605
    %v1607 = vsel %vm45, %v1603, 0.0
    %1608 = vadd.xlane.f32.xlu0 %v1607
    %v1609 = vpop.xlane.xlu0 %1608
    %v1610 = vmul.f32 %v1602, %v1602
    %v1611 = vmul.f32 %v1603, %v1603
    %v1612 = vsel %vm45, %v1610, 0.0
    %1613 = vadd.xlane.f32.xlu0 %v1612
    %v1614 = vpop.xlane.xlu0 %1613
    %v1615 = vsel %vm45, %v1611, 0.0
    %1616 = vadd.xlane.f32.xlu0 %v1615
    %v1617 = vpop.xlane.xlu0 %1616
    %v1618 = vmul.f32 %v1606, 0.03125
    %v1619 = vmul.f32 %v1609, 0.03125
    %v1620 = vmul.f32 %v1614, 0.03125
    %v1621 = vmul.f32 %v1617, 0.03125
    %v1622 = vmul.f32 %v1618, %v1618
    %v1623 = vmul.f32 %v1619, %v1619
    %v1624 = vsub.f32 %v1620, %v1622
    %v1625 = vsub.f32 %v1621, %v1623
    %v1626 = vadd.f32 %v1624, 1e-12
    %v1627 = vadd.f32 %v1625, 1e-12
    %v1628 = vrsqrt.pop %v1626
    %v1629 = vmul.f32 %v1628, %v1626
    %v1630 = vmul.f32 %v1629, %v1628
    %v1631 = vmul.f32 0.5, %v1630
    %v1632 = vsub.f32 1.5, %v1631
    %v1633 = vmul.f32 %v1628, %v1632
    %vm1634 = vweird.f32 %v1626
    %vm1635 = vweird.f32 %v1628
    %vm1636 = vmor %vm1634, %vm1635
    %v1637 = vsel %vm1636, %v1628, %v1633
    %v1638 = vrsqrt.pop %v1627
    %v1639 = vmul.f32 %v1638, %v1627
    %v1640 = vmul.f32 %v1639, %v1638
    %v1641 = vmul.f32 0.5, %v1640
    %v1642 = vsub.f32 1.5, %v1641
    %v1643 = vmul.f32 %v1638, %v1642
    %vm1644 = vweird.f32 %v1627
    %vm1645 = vweird.f32 %v1638
    %vm1646 = vmor %vm1644, %vm1645
    %v1647 = vsel %vm1646, %v1638, %v1643
    %v1648 = vsub.f32 %v1602, %v1618
    %v1649 = vsub.f32 %v1603, %v1619
    %v1650 = vmul.f32 %v1648, %v1637
    %v1651 = vmul.f32 %v1649, %v1647
    %v1652 = vperm.slane %v38, 2
    %v1653 = vmul.f32 %v1650, %v1652
    %v1654 = vmul.f32 %v1651, %v1652
    %v1655 = vperm.slane %v38, 3
    %v1656 = vadd.f32 %v1653, %v1655
    %v1657 = vadd.f32 %v1654, %v1655
    %v1658 = vpack.c.bf16 %v1657, %v1656
    %v1659 = vperm.slane %v38, 4
    %v1664 = vunpack.c.l.b16 %v959
    %v1665 = vunpack.c.l.b16 %v960
    %v1666 = vunpack.c.l.b16 %v961
    %v1667 = vunpack.c.l.b16 %v962
    %v1668 = vpack.c.b16 %v1665, %v1664
    %v1669 = vpack.c.b16 %v1667, %v1666
    %v1673 = vsel %vm45, %v1658, 0
    %1675 = vmatpush.bf16.msra.mxu0 0
    %1676 = vmatpush.bf16.msra.mxu0 0
    %1677 = vmatpush.bf16.msra.mxu0 0
    %1678 = vmatpush.bf16.msra.mxu0 0
    %1679 = vmatpush.bf16.msra.mxu0 0
    %1680 = vmatpush.bf16.msra.mxu0 0
    %1681 = vmatpush.bf16.msra.mxu0 %v1669
    %1682 = vmatpush.bf16.msra.mxu0 %v1668
    %1683 = vmatmul.bf16.gmra.mxu0 %v1673
    %v1684 = vpop.f32.mrf.mxu0
    %v1685 = vadd.f32 %v1659, %v1684
    %v1686 = vpop.f32.mrf.mxu0
    %v1687 = vadd.f32 %v1659, %v1686
    %1688 = vdwg.mxu0
    %v1689 = vmul.f32 %v1685, 0.5
    %v1690 = vmul.f32 %v1687, 0.5
    %v1691 = vmul.f32 %v1685, 0.044715
    %v1692 = vmul.f32 %v1687, 0.044715
    %v1693 = vmul.f32 %v1691, %v1685
    %v1694 = vmul.f32 %v1692, %v1687
    %v1695 = vmul.f32 %v1693, %v1685
    %v1696 = vmul.f32 %v1694, %v1687
    %v1697 = vadd.f32 %v1685, %v1695
    %v1698 = vadd.f32 %v1687, %v1696
    %v1699 = vmul.f32 %v1697, 0.7978846
    %v1700 = vmul.f32 %v1698, 0.7978846
    %v1701 = vtanh.pop %v1699
    %v1702 = vtanh.pop %v1700
    %v1703 = vadd.f32 %v1701, 1.0
    %v1704 = vadd.f32 %v1702, 1.0
    %v1705 = vmul.f32 %v1689, %v1703
    %v1706 = vmul.f32 %v1690, %v1704
    %v1707 = vpack.c.bf16 %v1706, %v1705
    %v1708 = vperm.slane %v38, 5
    %v1717 = vunpack.c.l.b16 %v963
    %v1718 = vunpack.c.l.b16 %v964
    %v1719 = vunpack.c.l.b16 %v965
    %v1720 = vunpack.c.l.b16 %v966
    %v1721 = vunpack.c.l.b16 %v967
    %v1722 = vunpack.c.l.b16 %v968
    %v1723 = vunpack.c.l.b16 %v969
    %v1724 = vunpack.c.l.b16 %v970
    %v1725 = vpack.c.b16 %v1718, %v1717
    %v1726 = vpack.c.b16 %v1720, %v1719
    %v1727 = vpack.c.b16 %v1722, %v1721
    %v1728 = vpack.c.b16 %v1724, %v1723
    %v1734 = vsel %vm881, %v1707, 0
    %1736 = vmatpush.bf16.msra.mxu0 0
    %1737 = vmatpush.bf16.msra.mxu0 0
    %1738 = vmatpush.bf16.msra.mxu0 0
    %1739 = vmatpush.bf16.msra.mxu0 0
    %1740 = vmatpush.bf16.msra.mxu0 %v1728
    %1741 = vmatpush.bf16.msra.mxu0 %v1727
    %1742 = vmatpush.bf16.msra.mxu0 %v1726
    %1743 = vmatpush.bf16.msra.mxu0 %v1725
    %1744 = vmatmul.bf16.gmra.mxu0 %v1734
    %v1745 = vpop.f32.mrf.mxu0
    %v1746 = vadd.f32 %v1708, %v1745
    %v1747 = vpop.f32.mrf.mxu0
    %v1748 = vadd.f32 %v1708, %v1747
    %1749 = vdwg.mxu0
    %v1750 = vadd.f32 %v1656, %v1746
    %v1751 = vadd.f32 %v1657, %v1748
    %v1752 = vsel %vm45, %v1750, 0.0
    %1753 = vadd.xlane.f32.xlu0 %v1752
    %v1754 = vpop.xlane.xlu0 %1753
    %v1755 = vsel %vm45, %v1751, 0.0
    %1756 = vadd.xlane.f32.xlu0 %v1755
    %v1757 = vpop.xlane.xlu0 %1756
    %v1758 = vmul.f32 %v1750, %v1750
    %v1759 = vmul.f32 %v1751, %v1751
    %v1760 = vsel %vm45, %v1758, 0.0
    %1761 = vadd.xlane.f32.xlu0 %v1760
    %v1762 = vpop.xlane.xlu0 %1761
    %v1763 = vsel %vm45, %v1759, 0.0
    %1764 = vadd.xlane.f32.xlu0 %v1763
    %v1765 = vpop.xlane.xlu0 %1764
    %v1766 = vmul.f32 %v1754, 0.03125
    %v1767 = vmul.f32 %v1757, 0.03125
    %v1768 = vmul.f32 %v1762, 0.03125
    %v1769 = vmul.f32 %v1765, 0.03125
    %v1770 = vmul.f32 %v1766, %v1766
    %v1771 = vmul.f32 %v1767, %v1767
    %v1772 = vsub.f32 %v1768, %v1770
    %v1773 = vsub.f32 %v1769, %v1771
    %v1774 = vadd.f32 %v1772, 1e-12
    %v1775 = vadd.f32 %v1773, 1e-12
    %v1776 = vrsqrt.pop %v1774
    %v1777 = vmul.f32 %v1776, %v1774
    %v1778 = vmul.f32 %v1777, %v1776
    %v1779 = vmul.f32 0.5, %v1778
    %v1780 = vsub.f32 1.5, %v1779
    %v1781 = vmul.f32 %v1776, %v1780
    %vm1782 = vweird.f32 %v1774
    %vm1783 = vweird.f32 %v1776
    %vm1784 = vmor %vm1782, %vm1783
    %v1785 = vsel %vm1784, %v1776, %v1781
    %v1786 = vrsqrt.pop %v1775
    %v1787 = vmul.f32 %v1786, %v1775
    %v1788 = vmul.f32 %v1787, %v1786
    %v1789 = vmul.f32 0.5, %v1788
    %v1790 = vsub.f32 1.5, %v1789
    %v1791 = vmul.f32 %v1786, %v1790
    %vm1792 = vweird.f32 %v1775
    %vm1793 = vweird.f32 %v1786
    %vm1794 = vmor %vm1792, %vm1793
    %v1795 = vsel %vm1794, %v1786, %v1791
    %v1796 = vsub.f32 %v1750, %v1766
    %v1797 = vsub.f32 %v1751, %v1767
    %v1798 = vmul.f32 %v1796, %v1785
    %v1799 = vmul.f32 %v1797, %v1795
    %v1800 = vperm.slane %v38, 6
    %v1801 = vmul.f32 %v1798, %v1800
    %v1802 = vmul.f32 %v1799, %v1800
    %v1803 = vperm.slane %v38, 7
    %v1804 = vadd.f32 %v1801, %v1803
    %v1805 = vadd.f32 %v1802, %v1803
    %v1806 = vadd.f32 %v953, %v1804
    %v1807 = vadd.f32 %v954, %v1805
    %1808 = vst.msk [vmem:[#allocation5] sm:$0xff] %vm45, %v1806
    %1809 = vst.msk [vmem:[#allocation5 + $0x8] sm:$0xff] %vm45, %v1807
    // Predicated region
    $region18: #{bert_mid_layer_forward.1} parent=1 // pred_check
      _
    $region19: #{bert_mid_layer_forward.1} parent=1 // pred_check_branch
      %1811 = sbr.rel (0) target = $region21
    $region20: #{bert_mid_layer_forward.1} parent=1 // pred_region
      %1813 = vsyncadd [#allocation4], 0
      %s1814 = sshll.u32 [#allocation5], 4
      %s1815 = int_to_ptr.vmem [resolvable:$true] %s1814
      %s1816 = sshll.u32 %s3, 4
      %s1817 = int_to_ptr.hbm [resolvable:$true] %s1816
      %1822 = dma.vmem_to_hbm [thread:$0]  %s1815, 256, %s1817, [#allocation4], 128, 128, 8
    $region21: #{bert_mid_layer_forward.1} parent=1 // pred_fallthru
      _
    // Predicated region
    $region22: #{bert_mid_layer_forward.1} parent=1 // pred_check
      _
    $region23: #{bert_mid_layer_forward.1} parent=1 // pred_check_branch
      %1824 = sbr.rel (0) target = $region25
    $region24: #{bert_mid_layer_forward.1} parent=1 // pred_region
      %1826 = dma.done [#allocation4], 256
    $region25: #{bert_mid_layer_forward.1} parent=1 // pred_fallthru
      _
    %1827 = vsyncpa [#allocation3], 1
    %1828 = vsyncpa [#allocation4], 1

</llo_original>
